<compile_context>
chip_gen: v6e
topology: v6e:2x2x1
jax: 0.10.0
libtpu: 0.0.40
codegen_flags: <defaults>
</compile_context>

<pallas_src>
import jax
import jax.numpy as jnp
from jax.experimental import pallas as pl
from jax.experimental.pallas import tpu as pltpu

IN_DIM = 773
H1 = 512
H2 = 256
OUT_DIM = 1


def _round_up(n, m):
    return ((n + m - 1) // m) * m


def dqn_kernel(x_ref, w1_ref, b1_ref, w2_ref, b2_ref, w3_ref, b3_ref, o_ref):
    # x: (tb, 773) f32/bf16 | w1: (773, 512) bf16 | b1: (1, 512) f32
    # w2: (512, 256) bf16   | b2: (1, 256) f32    | w3: (1, 256) bf16
    # b3: (1, 1) f32 in SMEM | out: (tb, 1) f32
    x = x_ref[...].astype(jnp.bfloat16)       # in-kernel cast (no extra HBM pass)

    # Layer 1: bf16 x bf16 MXU matmul, f32 accumulate; bias + ReLU in f32.
    h = jnp.dot(x, w1_ref[...], preferred_element_type=jnp.float32)
    h = jnp.maximum(h + b1_ref[...], 0.0)

    # Layer 2: re-quantize activations to bf16 for the MXU (deliberate trade).
    h = jnp.dot(h.astype(jnp.bfloat16), w2_ref[...],
                preferred_element_type=jnp.float32)
    h = jnp.maximum(h + b2_ref[...], 0.0)

    # Layer 3 (N=1): VPU broadcast-mul + XLU lane reduce; b3 scalar from SMEM.
    w3 = w3_ref[...].astype(jnp.float32)      # (1, 256)
    o = jnp.sum(h * w3, axis=-1, keepdims=True) + b3_ref[0, 0]
    o_ref[...] = o.astype(o_ref.dtype)


def _choose_tb(batch):
    """Batch tile: multiple of 16 (bf16 sublane packing).

    Tiny batches -> one tile.  Otherwise keep >= 2 grid steps (so the
    'parallel' batch axis can shard across both v7x TensorCores) and cap at
    2048 (comfortably inside a 48 MiB VMEM budget on every generation).
    """
    b16 = _round_up(max(batch, 1), 16)
    if b16 <= 256:
        return b16
    return min(2048, _round_up(pl.cdiv(b16, 2), 16))


def dqn_forward(x, params, *, tb=None):
    w1, b1, w2, b2, w3r, b3 = params
    B = x.shape[0]

    if tb is None:
        tb = _choose_tb(B)
    tb = max(16, _round_up(tb, 16))
    grid = (pl.cdiv(B, tb),)

    x_bytes = B * IN_DIM * x.dtype.itemsize
    w_bytes = (IN_DIM * H1 + H1 * H2 + H2) * 2 + (H1 + H2 + 1) * 4
    cost = pl.CostEstimate(
        flops=2 * B * (IN_DIM * H1 + H1 * H2 + H2),
        transcendentals=0,
        bytes_accessed=x_bytes + w_bytes + B * OUT_DIM * 4,
    )

    out = pl.pallas_call(
        dqn_kernel,
        out_shape=jax.ShapeDtypeStruct((B, OUT_DIM), jnp.float32),
        grid_spec=pltpu.PrefetchScalarGridSpec(
            num_scalar_prefetch=0,
            grid=grid,
            in_specs=[
                pl.BlockSpec((tb, IN_DIM), lambda i: (i, 0)),       # x tile (streamed)
                pl.BlockSpec((IN_DIM, H1), lambda i: (0, 0)),       # w1 (resident)
                pl.BlockSpec((1, H1), lambda i: (0, 0)),            # b1
                pl.BlockSpec((H1, H2), lambda i: (0, 0)),           # w2 (resident)
                pl.BlockSpec((1, H2), lambda i: (0, 0)),            # b2
                pl.BlockSpec((1, H2), lambda i: (0, 0)),            # w3 row (resident)
                pl.BlockSpec(memory_space=pltpu.MemorySpace.SMEM),  # b3 scalar
            ],
            out_specs=pl.BlockSpec((tb, OUT_DIM), lambda i: (i, 0)),
        ),
        compiler_params=pltpu.CompilerParams(
            dimension_semantics=("parallel",),
            vmem_limit_bytes=48 * 1024 * 1024,
        ),
        cost_estimate=cost,
    )(x, w1, b1, w2, b2, w3r, b3)
    return out[:B]


def init_params(key):
    """PyTorch-Linear-style init U(-1/sqrt(fan_in), 1/sqrt(fan_in)).

    Weights stored transposed as [in, out] in bf16 (w3 stored as a [1, 256]
    row); biases kept in f32, b3 as a (1, 1) scalar for SMEM.
    """
    ks = jax.random.split(key, 6)

    def linear(kw, kb, fan_in, fan_out):
        bound = 1.0 / jnp.sqrt(jnp.float32(fan_in))
        w = jax.random.uniform(kw, (fan_in, fan_out), jnp.float32, -bound, bound)
        b = jax.random.uniform(kb, (1, fan_out), jnp.float32, -bound, bound)
        return w, b

    w1, b1 = linear(ks[0], ks[1], IN_DIM, H1)
    w2, b2 = linear(ks[2], ks[3], H1, H2)
    w3, b3 = linear(ks[4], ks[5], H2, OUT_DIM)

    return (w1.astype(jnp.bfloat16), b1,
            w2.astype(jnp.bfloat16), b2,
            w3.T.astype(jnp.bfloat16), b3)        # w3 as (1, 256) row


def reference_forward(x, params):
    """Pure-JAX reference mirroring the kernel's bf16 storage / f32 accumulate."""
    w1, b1, w2, b2, w3r, b3 = params
    xb = x.astype(jnp.bfloat16).astype(jnp.float32)
    hi = jax.lax.Precision.HIGHEST
    h = jnp.maximum(
        jnp.dot(xb, w1.astype(jnp.float32), precision=hi) + b1, 0.0)
    h = jnp.maximum(
        jnp.dot(h.astype(jnp.bfloat16).astype(jnp.float32),
                w2.astype(jnp.float32), precision=hi) + b2, 0.0)
    return jnp.sum(h * w3r.astype(jnp.float32), axis=-1, keepdims=True) + b3[0, 0]


if __name__ == "__main__":
    key = jax.random.PRNGKey(0)
    kx, kp = jax.random.split(key)

    # Small, deliberately non-multiple-of-16 batch: exercises the multi-tile
    # pipelined grid AND the masked partial edge block (cdiv grid, no row pad).
    B = 37
    x = jax.random.normal(kx, (B, IN_DIM), jnp.float32)
    params = init_params(kp)

    out = dqn_forward(x, params, tb=16)
    jax.block_until_ready(out)

    ref = reference_forward(x, params)
    assert out.shape == (B, OUT_DIM), out.shape
    assert jnp.allclose(out, ref, atol=2e-3, rtol=2e-3), "mismatch vs JAX reference"

    print("KERNEL_OK")
</pallas_src>

<mosaic_0001>
module attributes {stable_mosaic.version = 11 : i64} {
  func.func @dqn_kernel(%arg0: i32, %arg1: memref<16x773xf32, #tpu.memory_space<vmem>>, %arg2: memref<773x512xbf16, #tpu.memory_space<vmem>>, %arg3: memref<1x512xf32, #tpu.memory_space<vmem>>, %arg4: memref<512x256xbf16, #tpu.memory_space<vmem>>, %arg5: memref<1x256xf32, #tpu.memory_space<vmem>>, %arg6: memref<1x256xbf16, #tpu.memory_space<vmem>>, %arg7: memref<1x1xf32, #tpu.memory_space<smem>>, %arg8: memref<16x1xf32, #tpu.memory_space<vmem>>) attributes {dimension_semantics = [#tpu.dimension_semantics<parallel>], iteration_bounds = array<i64: 3>, scalar_prefetch = 0 : i64, scratch_operands = 0 : i64, tpu.core_type = #tpu.core_type<tc>, window_params = [{transform_indices = @transform_0, window_bounds = array<i64: 16, 773>}, {pipeline_mode = #tpu.pipeline_mode<synchronous>, transform_indices = @transform_1, window_bounds = array<i64: 773, 512>}, {pipeline_mode = #tpu.pipeline_mode<synchronous>, transform_indices = @transform_2, window_bounds = array<i64: 1, 512>}, {pipeline_mode = #tpu.pipeline_mode<synchronous>, transform_indices = @transform_3, window_bounds = array<i64: 512, 256>}, {pipeline_mode = #tpu.pipeline_mode<synchronous>, transform_indices = @transform_4, window_bounds = array<i64: 1, 256>}, {pipeline_mode = #tpu.pipeline_mode<synchronous>, transform_indices = @transform_5, window_bounds = array<i64: 1, 256>}, {transform_indices = @transform_6, window_bounds = array<i64: 1, 1>}, {transform_indices = @transform_7, window_bounds = array<i64: 16, 1>}]} {
    %c0 = arith.constant 0 : index
    %c0_0 = arith.constant 0 : index
    %0 = vector.load %arg1[%c0, %c0_0] : memref<16x773xf32, #tpu.memory_space<vmem>>, vector<16x773xf32>
    %1 = arith.truncf %0 : vector<16x773xf32> to vector<16x773xbf16>
    %c0_1 = arith.constant 0 : index
    %c0_2 = arith.constant 0 : index
    %2 = vector.load %arg2[%c0_1, %c0_2] : memref<773x512xbf16, #tpu.memory_space<vmem>>, vector<773x512xbf16>
    %cst = arith.constant dense<0.000000e+00> : vector<16x512xf32>
    %3 = tpu.matmul %1, %2, %cst {dimension_numbers = #tpu.dot_dimension_numbers<[1], [0], [0], [1], [0, 0, 1, 1], [], []>} : vector<16x773xbf16>, vector<773x512xbf16>, vector<16x512xf32> -> vector<16x512xf32>
    %c0_3 = arith.constant 0 : index
    %c0_4 = arith.constant 0 : index
    %4 = vector.load %arg3[%c0_3, %c0_4] : memref<1x512xf32, #tpu.memory_space<vmem>>, vector<1x512xf32>
    %5 = vector.broadcast %4 : vector<1x512xf32> to vector<16x512xf32>
    %6 = arith.addf %3, %5 : vector<16x512xf32>
    %cst_5 = arith.constant 0.000000e+00 : f32
    %7 = vector.broadcast %cst_5 : f32 to vector<16x512xf32>
    %8 = arith.maximumf %6, %7 : vector<16x512xf32>
    %9 = arith.truncf %8 : vector<16x512xf32> to vector<16x512xbf16>
    %c0_6 = arith.constant 0 : index
    %c0_7 = arith.constant 0 : index
    %10 = vector.load %arg4[%c0_6, %c0_7] : memref<512x256xbf16, #tpu.memory_space<vmem>>, vector<512x256xbf16>
    %cst_8 = arith.constant dense<0.000000e+00> : vector<16x256xf32>
    %11 = tpu.matmul %9, %10, %cst_8 {dimension_numbers = #tpu.dot_dimension_numbers<[1], [0], [0], [1], [0, 0, 1, 1], [], []>} : vector<16x512xbf16>, vector<512x256xbf16>, vector<16x256xf32> -> vector<16x256xf32>
    %c0_9 = arith.constant 0 : index
    %c0_10 = arith.constant 0 : index
    %12 = vector.load %arg5[%c0_9, %c0_10] : memref<1x256xf32, #tpu.memory_space<vmem>>, vector<1x256xf32>
    %13 = vector.broadcast %12 : vector<1x256xf32> to vector<16x256xf32>
    %14 = arith.addf %11, %13 : vector<16x256xf32>
    %cst_11 = arith.constant 0.000000e+00 : f32
    %15 = vector.broadcast %cst_11 : f32 to vector<16x256xf32>
    %16 = arith.maximumf %14, %15 : vector<16x256xf32>
    %c0_12 = arith.constant 0 : index
    %c0_13 = arith.constant 0 : index
    %17 = vector.load %arg6[%c0_12, %c0_13] : memref<1x256xbf16, #tpu.memory_space<vmem>>, vector<1x256xbf16>
    %18 = arith.extf %17 : vector<1x256xbf16> to vector<1x256xf32>
    %19 = vector.broadcast %18 : vector<1x256xf32> to vector<16x256xf32>
    %20 = arith.mulf %16, %19 : vector<16x256xf32>
    %cst_14 = arith.constant dense<0.000000e+00> : vector<16xf32>
    %21 = vector.multi_reduction <add>, %20, %cst_14 [1] : vector<16x256xf32> to vector<16xf32>
    %22 = vector.shape_cast %21 : vector<16xf32> to vector<16x1xf32>
    %c0_15 = arith.constant 0 : index
    %c0_16 = arith.constant 0 : index
    %23 = memref.load %arg7[%c0_15, %c0_16] : memref<1x1xf32, #tpu.memory_space<smem>>
    %24 = vector.broadcast %23 : f32 to vector<16x1xf32>
    %25 = arith.addf %22, %24 : vector<16x1xf32>
    %c0_17 = arith.constant 0 : index
    %c0_18 = arith.constant 0 : index
    %26 = vector.load %arg8[%c0_17, %c0_18] : memref<16x1xf32, #tpu.memory_space<vmem>>, vector<16x1xf32>
    tpu.vector_store %arg8[%c0_17, %c0_18], %25 {strides = array<i32>} : memref<16x1xf32, #tpu.memory_space<vmem>>, vector<16x1xf32>,
    return
  }
  func.func @transform_0(%arg0: i32) -> (i32, i32) {
    %c0_i32 = arith.constant 0 : i32
    %c0_i32_0 = arith.constant 0 : i32
    return %arg0, %c0_i32 : i32, i32
  }
  func.func @transform_1(%arg0: i32) -> (i32, i32) {
    %c0_i32 = arith.constant 0 : i32
    %c0_i32_0 = arith.constant 0 : i32
    %c0_i32_1 = arith.constant 0 : i32
    return %c0_i32, %c0_i32_0 : i32, i32
  }
  func.func @transform_2(%arg0: i32) -> (i32, i32) {
    %c0_i32 = arith.constant 0 : i32
    %c0_i32_0 = arith.constant 0 : i32
    %c0_i32_1 = arith.constant 0 : i32
    return %c0_i32, %c0_i32_0 : i32, i32
  }
  func.func @transform_3(%arg0: i32) -> (i32, i32) {
    %c0_i32 = arith.constant 0 : i32
    %c0_i32_0 = arith.constant 0 : i32
    %c0_i32_1 = arith.constant 0 : i32
    return %c0_i32, %c0_i32_0 : i32, i32
  }
  func.func @transform_4(%arg0: i32) -> (i32, i32) {
    %c0_i32 = arith.constant 0 : i32
    %c0_i32_0 = arith.constant 0 : i32
    %c0_i32_1 = arith.constant 0 : i32
    return %c0_i32, %c0_i32_0 : i32, i32
  }
  func.func @transform_5(%arg0: i32) -> (i32, i32) {
    %c0_i32 = arith.constant 0 : i32
    %c0_i32_0 = arith.constant 0 : i32
    %c0_i32_1 = arith.constant 0 : i32
    return %c0_i32, %c0_i32_0 : i32, i32
  }
  func.func @transform_6(%arg0: i32) -> (i32, i32) {
    %c0_i32 = arith.constant 0 : i32
    %c0_i32_0 = arith.constant 0 : i32
    %c0_i32_1 = arith.constant 0 : i32
    return %c0_i32, %c0_i32_0 : i32, i32
  }
  func.func @transform_7(%arg0: i32) -> (i32, i32) {
    %c0_i32 = arith.constant 0 : i32
    %c0_i32_0 = arith.constant 0 : i32
    return %arg0, %c0_i32 : i32, i32
  }
}

</mosaic_0001>

<llo_original>
// kernel: tpu_custom_call.1
$region0: #{tpu_custom_call.1}
  #allocation0 [shape = 'u32[]', space=smem, size = 0x4, offset = 0x4, fixed_abs, tag = 'smem constant byte address 0x4 - core index']
  #allocation1 [shape = 'u32[144,128]{1,0:T(1,128)}', space=vmem, size = 0x12000, scoped, tag = 'internal scratch']
  #allocation2 [shape = 'f32[1,1]{1,0:T(1,128)S(6)}', space=smem, size = 0x200, scoped, tag = 'scoped memory for tpu_custom_call.1']
  %s0 = inlined_call_operand.hbm [shape: f32[37,773], index: 0, kind: input, shape index: {}]
  %s1 = inlined_call_operand.hbm [shape: bf16[773,512], index: 1, kind: input, shape index: {}]
  %s2 = inlined_call_operand.vmem [shape: f32[1,512], index: 2, kind: input, shape index: {}]
  %s3 = inlined_call_operand.hbm [shape: bf16[512,256], index: 3, kind: input, shape index: {}]
  %s4 = inlined_call_operand.vmem [shape: f32[1,256], index: 4, kind: input, shape index: {}]
  %s5 = inlined_call_operand.vmem [shape: bf16[1,256], index: 5, kind: input, shape index: {}]
  %s6 = inlined_call_operand.<no memory space> [shape: f32[1,1], index: 6, kind: input, shape index: {}]
  %s7 = inlined_call_operand.vmem [shape: f32[37,1], index: 7, kind: output, shape index: {}]
  %s8 = sld [smem:[#allocation0]]
  $region121: #{tpu_custom_call.1} parent=0
    _
  %s10 = ssub.s32 1, %s8
  %s11 = scalar_select 0, %s10, %s8
  %12 = sst [smem:[#allocation2]] %s6
  $region1: #{tpu_custom_call.1} parent=0
    #allocation3 [shape = 'u8[114688]{0}', space=vmem, size = 0x1c000, scoped, tag = 'input window, operand 0']
    #allocation4 [shape = 's32[2]{0}', space=sflag, size = 0x8, scoped, tag = 'scoped memory for tpu_custom_call.1']
    #allocation5 [shape = 'u8[794624]{0}', space=vmem, size = 0xc2000, scoped, tag = 'input window, operand 1, single buffered']
    #allocation6 [shape = 's32[1]{0}', space=sflag, size = 0x4, scoped, tag = 'scoped memory for tpu_custom_call.1']
    #allocation7 [shape = 'u8[262144]{0}', space=vmem, size = 0x40000, scoped, tag = 'input window, operand 3, single buffered']
    #allocation8 [shape = 'u8[16384]{0}', space=vmem, size = 0x4000, scoped, tag = 'output window, operand 0']
    %13 = vsyncpa [#allocation4], 0
    %s14 = scalar_lea.sflag [#allocation4], 1
    %15 = vsyncpa %s14, 0
    %16 = vsyncpa [#allocation6], 0
    loop: start=0, step=1, limit=5
    $region2: #{tpu_custom_call.1} parent=1 // loop_pre_header
      _
    $region3: #{tpu_custom_call.1} parent=1 // loop_header
      %s18 = sphi 0, %s22
      %p19 = scmp.ge.s32.totalorder %s18, 5
      %s28 = sphi 0, %s30
      %s31 = sphi 0, %s28
      %s32 = sphi 0, %s31
      %s48 = sphi 0, %s32
      %s52 = sphi 0, %s52
      %s54 = sphi 0, %s52
      %s55 = sphi 0, %s54
      %s69 = sphi 0, %s55
      %s73 = sphi 0, %s73
      %s75 = sphi 0, %s73
      %s76 = sphi 0, %s75
      %s90 = sphi 0, %s76
      %s94 = sphi 0, %s94
      %s96 = sphi 0, %s94
      %s97 = sphi 0, %s96
      %s111 = sphi 0, %s97
      %s115 = sphi 0, %s115
      %s117 = sphi 0, %s115
      %s118 = sphi 0, %s117
      %s132 = sphi 0, %s118
      %s136 = sphi 0, %s136
      %s138 = sphi 0, %s136
      %s139 = sphi 0, %s138
      %s153 = sphi 0, %s139
      %s157 = sphi 0, %s157
      %s159 = sphi 0, %s157
      %s160 = sphi 0, %s159
      %s174 = sphi 0, %s160
      %s180 = sphi 0, %s182
      %s183 = sphi 0, %s180
      %s184 = sphi 0, %s183
      %s200 = sphi 0, %s184
    $region4: #{tpu_custom_call.1} parent=1 // loop_header_branch
      %21 = sbr.rel (%p19) target = $region8
    $region5: #{tpu_custom_call.1} parent=1 // loop_body
      %s23 = ssub.s32 %s18, 1
      %s24 = ssub.s32 %s18, 2
      %s25 = sadd.s32 %s18, 1
      %s26 = ssub.s32 %s18, %s25
      %p27 = scmp.eq.s32.totalorder %s26, 0
      %s29 = sadd.s32 %s28, 1
      %s30 = scalar_select %p27, %s28, %s29
      %p33 = pneg %p27
      %p34 = scmp.eq.s32.totalorder %s18, 2
      %p35 = por %p33, %p34
      %p36 = scmp.ne.s32.totalorder %s28, %s31
      %p37 = scmp.eq.s32.totalorder %s18, 0
      %p38 = por %p36, %p37
      %p39 = scmp.ne.s32.totalorder %s28, %s31
      %p40 = scmp.eq.s32.totalorder %s23, 2
      %p41 = por %p39, %p40
      %p42 = scmp.ne.s32.totalorder %s31, %s32
      %p43 = scmp.eq.s32.totalorder %s23, 0
      %p44 = por %p42, %p43
      %p45 = scmp.ne.s32.totalorder %s31, %s32
      %p46 = scmp.eq.s32.totalorder %s24, 2
      %p47 = por %p45, %p46
      %p49 = scmp.ne.s32.totalorder %s32, %s48
      %p50 = scmp.eq.s32.totalorder %s24, 0
      %p51 = por %p49, %p50
      %s53 = sadd.s32 %s52, 1
      %p56 = scmp.eq.s32.totalorder %s18, 2
      %p57 = scmp.ne.s32.totalorder %s52, %s54
      %p58 = scmp.eq.s32.totalorder %s18, 0
      %p59 = por %p57, %p58
      %p60 = scmp.ne.s32.totalorder %s52, %s54
      %p61 = scmp.eq.s32.totalorder %s23, 2
      %p62 = por %p60, %p61
      %p63 = scmp.ne.s32.totalorder %s54, %s55
      %p64 = scmp.eq.s32.totalorder %s23, 0
      %p65 = por %p63, %p64
      %p66 = scmp.ne.s32.totalorder %s54, %s55
      %p67 = scmp.eq.s32.totalorder %s24, 2
      %p68 = por %p66, %p67
      %p70 = scmp.ne.s32.totalorder %s55, %s69
      %p71 = scmp.eq.s32.totalorder %s24, 0
      %p72 = por %p70, %p71
      %s74 = sadd.s32 %s73, 1
      %p77 = scmp.eq.s32.totalorder %s18, 2
      %p78 = scmp.ne.s32.totalorder %s73, %s75
      %p79 = scmp.eq.s32.totalorder %s18, 0
      %p80 = por %p78, %p79
      %p81 = scmp.ne.s32.totalorder %s73, %s75
      %p82 = scmp.eq.s32.totalorder %s23, 2
      %p83 = por %p81, %p82
      %p84 = scmp.ne.s32.totalorder %s75, %s76
      %p85 = scmp.eq.s32.totalorder %s23, 0
      %p86 = por %p84, %p85
      %p87 = scmp.ne.s32.totalorder %s75, %s76
      %p88 = scmp.eq.s32.totalorder %s24, 2
      %p89 = por %p87, %p88
      %p91 = scmp.ne.s32.totalorder %s76, %s90
      %p92 = scmp.eq.s32.totalorder %s24, 0
      %p93 = por %p91, %p92
      %s95 = sadd.s32 %s94, 1
      %p98 = scmp.eq.s32.totalorder %s18, 2
      %p99 = scmp.ne.s32.totalorder %s94, %s96
      %p100 = scmp.eq.s32.totalorder %s18, 0
      %p101 = por %p99, %p100
      %p102 = scmp.ne.s32.totalorder %s94, %s96
      %p103 = scmp.eq.s32.totalorder %s23, 2
      %p104 = por %p102, %p103
      %p105 = scmp.ne.s32.totalorder %s96, %s97
      %p106 = scmp.eq.s32.totalorder %s23, 0
      %p107 = por %p105, %p106
      %p108 = scmp.ne.s32.totalorder %s96, %s97
      %p109 = scmp.eq.s32.totalorder %s24, 2
      %p110 = por %p108, %p109
      %p112 = scmp.ne.s32.totalorder %s97, %s111
      %p113 = scmp.eq.s32.totalorder %s24, 0
      %p114 = por %p112, %p113
      %s116 = sadd.s32 %s115, 1
      %p119 = scmp.eq.s32.totalorder %s18, 2
      %p120 = scmp.ne.s32.totalorder %s115, %s117
      %p121 = scmp.eq.s32.totalorder %s18, 0
      %p122 = por %p120, %p121
      %p123 = scmp.ne.s32.totalorder %s115, %s117
      %p124 = scmp.eq.s32.totalorder %s23, 2
      %p125 = por %p123, %p124
      %p126 = scmp.ne.s32.totalorder %s117, %s118
      %p127 = scmp.eq.s32.totalorder %s23, 0
      %p128 = por %p126, %p127
      %p129 = scmp.ne.s32.totalorder %s117, %s118
      %p130 = scmp.eq.s32.totalorder %s24, 2
      %p131 = por %p129, %p130
      %p133 = scmp.ne.s32.totalorder %s118, %s132
      %p134 = scmp.eq.s32.totalorder %s24, 0
      %p135 = por %p133, %p134
      %s137 = sadd.s32 %s136, 1
      %p140 = scmp.eq.s32.totalorder %s18, 2
      %p141 = scmp.ne.s32.totalorder %s136, %s138
      %p142 = scmp.eq.s32.totalorder %s18, 0
      %p143 = por %p141, %p142
      %p144 = scmp.ne.s32.totalorder %s136, %s138
      %p145 = scmp.eq.s32.totalorder %s23, 2
      %p146 = por %p144, %p145
      %p147 = scmp.ne.s32.totalorder %s138, %s139
      %p148 = scmp.eq.s32.totalorder %s23, 0
      %p149 = por %p147, %p148
      %p150 = scmp.ne.s32.totalorder %s138, %s139
      %p151 = scmp.eq.s32.totalorder %s24, 2
      %p152 = por %p150, %p151
      %p154 = scmp.ne.s32.totalorder %s139, %s153
      %p155 = scmp.eq.s32.totalorder %s24, 0
      %p156 = por %p154, %p155
      %s158 = sadd.s32 %s157, 1
      %p161 = scmp.eq.s32.totalorder %s18, 2
      %p162 = scmp.ne.s32.totalorder %s157, %s159
      %p163 = scmp.eq.s32.totalorder %s18, 0
      %p164 = por %p162, %p163
      %p165 = scmp.ne.s32.totalorder %s157, %s159
      %p166 = scmp.eq.s32.totalorder %s23, 2
      %p167 = por %p165, %p166
      %p168 = scmp.ne.s32.totalorder %s159, %s160
      %p169 = scmp.eq.s32.totalorder %s23, 0
      %p170 = por %p168, %p169
      %p171 = scmp.ne.s32.totalorder %s159, %s160
      %p172 = scmp.eq.s32.totalorder %s24, 2
      %p173 = por %p171, %p172
      %p175 = scmp.ne.s32.totalorder %s160, %s174
      %p176 = scmp.eq.s32.totalorder %s24, 0
      %p177 = por %p175, %p176
      %s178 = ssub.s32 %s18, %s25
      %p179 = scmp.eq.s32.totalorder %s178, 0
      %s181 = sadd.s32 %s180, 1
      %s182 = scalar_select %p179, %s180, %s181
      %p185 = pneg %p179
      %p186 = scmp.eq.s32.totalorder %s18, 2
      %p187 = por %p185, %p186
      %p188 = scmp.ne.s32.totalorder %s180, %s183
      %p189 = scmp.eq.s32.totalorder %s18, 0
      %p190 = por %p188, %p189
      %p191 = scmp.ne.s32.totalorder %s180, %s183
      %p192 = scmp.eq.s32.totalorder %s23, 2
      %p193 = por %p191, %p192
      %p194 = scmp.ne.s32.totalorder %s183, %s184
      %p195 = scmp.eq.s32.totalorder %s23, 0
      %p196 = por %p194, %p195
      %p197 = scmp.ne.s32.totalorder %s183, %s184
      %p198 = scmp.eq.s32.totalorder %s24, 2
      %p199 = por %p197, %p198
      %p201 = scmp.ne.s32.totalorder %s184, %s200
      %p202 = scmp.eq.s32.totalorder %s24, 0
      %p203 = por %p201, %p202
      %p204 = scmp.le.s32.totalorder 1, %s18
      %p205 = scmp.lt.s32.totalorder %s18, 4
      %p206 = pnand %p204, %p205
      %p207 = pneg %p206
      // Predicated region
      $region9: #{tpu_custom_call.1} parent=5 // pred_check
        _
      $region10: #{tpu_custom_call.1} parent=5 // pred_check_branch
        %209 = sbr.rel (%p206) target = $region12
      $region11: #{tpu_custom_call.1} parent=5 // pred_region
        %s210 = ssub.s32 %s18, 1
        // Predicated region
        $region13: #{tpu_custom_call.1} parent=11 // pred_check
          %p211 = pneg %p65
        $region14: #{tpu_custom_call.1} parent=11 // pred_check_branch
          %213 = sbr.rel (%p211) target = $region16
        $region15: #{tpu_custom_call.1} parent=11 // pred_region
          %s215 = ssub.s32 24832, 24832
          %216 = vsyncadd [#allocation6], %s215
          %s217 = sshll.u32 [#allocation5], 4
          %s218 = int_to_ptr.vmem [resolvable:$true] %s217
          %223 = dma.hbm_to_vmem [thread:$0]  %s1, 24832, %s218, [#allocation6], 256, 256, 16
        $region16: #{tpu_custom_call.1} parent=11 // pred_fallthru
          _
        // Predicated region
        $region17: #{tpu_custom_call.1} parent=11 // pred_check
          %p224 = pneg %p86
        $region18: #{tpu_custom_call.1} parent=11 // pred_check_branch
          %226 = sbr.rel (%p224) target = $region20
        $region19: #{tpu_custom_call.1} parent=11 // pred_region
          _
        $region20: #{tpu_custom_call.1} parent=11 // pred_fallthru
          _
        // Predicated region
        $region21: #{tpu_custom_call.1} parent=11 // pred_check
          %p227 = pneg %p107
        $region22: #{tpu_custom_call.1} parent=11 // pred_check_branch
          %229 = sbr.rel (%p227) target = $region24
        $region23: #{tpu_custom_call.1} parent=11 // pred_region
          %s231 = ssub.s32 8192, 8192
          %232 = vsyncadd [#allocation6], %s231
          %s233 = sshll.u32 [#allocation7], 4
          %s234 = int_to_ptr.vmem [resolvable:$true] %s233
          %239 = dma.hbm_to_vmem [thread:$0]  %s3, 8192, %s234, [#allocation6], 128, 128, 8
        $region24: #{tpu_custom_call.1} parent=11 // pred_fallthru
          _
        // Predicated region
        $region25: #{tpu_custom_call.1} parent=11 // pred_check
          %p240 = pneg %p128
        $region26: #{tpu_custom_call.1} parent=11 // pred_check_branch
          %242 = sbr.rel (%p240) target = $region28
        $region27: #{tpu_custom_call.1} parent=11 // pred_region
          _
        $region28: #{tpu_custom_call.1} parent=11 // pred_fallthru
          _
        // Predicated region
        $region29: #{tpu_custom_call.1} parent=11 // pred_check
          %p243 = pneg %p149
        $region30: #{tpu_custom_call.1} parent=11 // pred_check_branch
          %245 = sbr.rel (%p243) target = $region32
        $region31: #{tpu_custom_call.1} parent=11 // pred_region
          _
        $region32: #{tpu_custom_call.1} parent=11 // pred_fallthru
          _
        // Predicated region
        $region33: #{tpu_custom_call.1} parent=11 // pred_check
          %p246 = pneg %p170
        $region34: #{tpu_custom_call.1} parent=11 // pred_check_branch
          %248 = sbr.rel (%p246) target = $region36
        $region35: #{tpu_custom_call.1} parent=11 // pred_region
          _
        $region36: #{tpu_custom_call.1} parent=11 // pred_fallthru
          _
      $region12: #{tpu_custom_call.1} parent=5 // pred_fallthru
        _
      %p249 = scmp.lt.s32.totalorder %s18, 3
      // Predicated region
      $region37: #{tpu_custom_call.1} parent=5 // pred_check
        %p250 = pneg %p249
      $region38: #{tpu_custom_call.1} parent=5 // pred_check_branch
        %252 = sbr.rel (%p250) target = $region40
      $region39: #{tpu_custom_call.1} parent=5 // pred_region
        // Predicated region
        $region41: #{tpu_custom_call.1} parent=39 // pred_check
          %p253 = pneg %p38
        $region42: #{tpu_custom_call.1} parent=39 // pred_check_branch
          %255 = sbr.rel (%p253) target = $region44
        $region43: #{tpu_custom_call.1} parent=39 // pred_region
          %s256 = sand.u32 %s28, 1
          %s257 = scalar_lea.sflag [#allocation4], %s256
          %s258 = sand.u32 %s28, 1
          %s259 = smul.addr %s258, 112
          %s260 = scalar_lea.vmem [#allocation3], %s259
          %s261 = smul.u32 2, %s18
          %s262 = ssub.s32 5, %s261
          %p263 = scmp.lt.s32.totalorder %s262, 2
          %s264 = scalar_select %p263, %s262, 2
          %s265 = smul.u32 128, %s264
          %s266 = smul.u32 %s265, 7
          %s268 = ssub.s32 1792, %s266
          %269 = vsyncadd %s257, %s268
          %p270 = scmp.ne.s32.totalorder 0, %s266
          %s271 = smul.addr %s261, 7
          %s272 = smul.addr %s271, 128
          %s273 = scalar_lea.hbm %s0, %s272
          %s274 = smul.u32 56, %s264
          %s275 = sshll.u32 %s260, 4
          %s276 = int_to_ptr.vmem [resolvable:$true] %s275
          %s277 = sshll.u32 %s274, 4
          %281 = dma.hbm_to_vmem [thread:$0]  (%p270), %s273, %s277, %s276, %s257, 896, 896, 56
        $region44: #{tpu_custom_call.1} parent=39 // pred_fallthru
          _
      $region40: #{tpu_custom_call.1} parent=5 // pred_fallthru
        _
      %p282 = scmp.le.s32.totalorder 1, %s18
      %p283 = scmp.lt.s32.totalorder %s18, 4
      %p284 = pnand %p282, %p283
      %p285 = pneg %p284
      // Predicated region
      $region45: #{tpu_custom_call.1} parent=5 // pred_check
        _
      $region46: #{tpu_custom_call.1} parent=5 // pred_check_branch
        %287 = sbr.rel (%p284) target = $region48
      $region47: #{tpu_custom_call.1} parent=5 // pred_region
        %s288 = ssub.s32 %s18, 1
        %s289 = sand.u32 %s31, 1
        %s290 = scalar_lea.sflag [#allocation4], %s289
        %s291 = sand.u32 %s31, 1
        %s292 = smul.addr %s291, 112
        %s293 = scalar_lea.vmem [#allocation3], %s292
        // Predicated region
        $region49: #{tpu_custom_call.1} parent=47 // pred_check
          %p294 = pneg %p44
        $region50: #{tpu_custom_call.1} parent=47 // pred_check_branch
          %296 = sbr.rel (%p294) target = $region52
        $region51: #{tpu_custom_call.1} parent=47 // pred_region
          %297 = dma.done %s290, 1792
        $region52: #{tpu_custom_call.1} parent=47 // pred_fallthru
          _
        // Predicated region
        $region53: #{tpu_custom_call.1} parent=47 // pred_check
          %p298 = pneg %p65
        $region54: #{tpu_custom_call.1} parent=47 // pred_check_branch
          %300 = sbr.rel (%p298) target = $region56
        $region55: #{tpu_custom_call.1} parent=47 // pred_region
          %301 = dma.done [#allocation6], 24832
        $region56: #{tpu_custom_call.1} parent=47 // pred_fallthru
          _
        // Predicated region
        $region57: #{tpu_custom_call.1} parent=47 // pred_check
          %p302 = pneg %p107
        $region58: #{tpu_custom_call.1} parent=47 // pred_check_branch
          %304 = sbr.rel (%p302) target = $region60
        $region59: #{tpu_custom_call.1} parent=47 // pred_region
          %305 = dma.done [#allocation6], 8192
        $region60: #{tpu_custom_call.1} parent=47 // pred_fallthru
          _
        %s306 = sand.u32 %s31, 1
        %s307 = scalar_lea.sflag [#allocation4], %s306
        %s308 = sand.u32 %s31, 1
        %s309 = smul.addr %s308, 112
        %s310 = scalar_lea.vmem [#allocation3], %s309
        %p311 = pneg %p44
        %p312 = pneg %p41
        %p313 = pneg %p65
        %p314 = pneg %p62
        %p315 = pneg %p86
        %p316 = pneg %p83
        %p317 = pneg %p107
        %p318 = pneg %p104
        %p319 = pneg %p128
        %p320 = pneg %p125
        %p321 = pneg %p149
        %p322 = pneg %p146
        %p323 = pneg %p170
        %p324 = pneg %p167
        %p325 = pneg %p196
        %p326 = pneg %p193
        %s327 = sand.u32 %s183, 1
        %s328 = sand.u32 %s183, 1
        %s329 = smul.addr %s328, 16
        %s330 = scalar_lea.vmem [#allocation8], %s329
        %s331 = smul.u32 2, %s23
        %s332 = ssub.s32 5, %s331
        %p333 = scmp.lt.s32.totalorder %s332, 2
        %s334 = scalar_select %p333, %s332, 2
        %s335 = smul.u32 128, %s334
        %s336 = smul.u32 %s335, 7
        %s337 = smul.u32 2, %s23
        %s338 = ssub.s32 5, %s337
        %p339 = scmp.lt.s32.totalorder %s338, 2
        %s340 = scalar_select %p339, %s338, 2
        %s341 = smul.u32 128, %s340
        %v343 = vld [vmem:[%s293] sm:$0xff]
        %v344 = vld [vmem:[%s293 + $0x8] sm:$0xff]
        %v345 = vld [vmem:[%s293 + $0x10] sm:$0xff]
        %v346 = vld [vmem:[%s293 + $0x18] sm:$0xff]
        %v347 = vld [vmem:[%s293 + $0x20] sm:$0xff]
        %v348 = vld [vmem:[%s293 + $0x28] sm:$0xff]
        %v349 = vld [vmem:[%s293 + $0x30] sm:$0xff]
        %v350 = vld [vmem:[%s293 + $0x38] sm:$0xff]
        %v351 = vld [vmem:[%s293 + $0x40] sm:$0xff]
        %v352 = vld [vmem:[%s293 + $0x48] sm:$0xff]
        %v353 = vld [vmem:[%s293 + $0x50] sm:$0xff]
        %v354 = vld [vmem:[%s293 + $0x58] sm:$0xff]
        %v355 = vld [vmem:[%s293 + $0x60] sm:$0xff]
        %v356 = vld [vmem:[%s293 + $0x68] sm:$0xff]
        %v357 = vpack.c.bf16 %v350, %v343
        %v358 = vpack.c.bf16 %v351, %v344
        %v359 = vpack.c.bf16 %v352, %v345
        %v360 = vpack.c.bf16 %v353, %v346
        %v361 = vpack.c.bf16 %v354, %v347
        %v362 = vpack.c.bf16 %v355, %v348
        %v363 = vpack.c.bf16 %v356, %v349
        %v364 = vld [vmem:[#allocation5] sm:$0xff]
        %v365 = vld [vmem:[#allocation5 + $0x8] sm:$0xff]
        %v366 = vld [vmem:[#allocation5 + $0x10] sm:$0xff]
        %v367 = vld [vmem:[#allocation5 + $0x18] sm:$0xff]
        %v368 = vld [vmem:[#allocation5 + $0x20] sm:$0xff]
        %v369 = vld [vmem:[#allocation5 + $0x28] sm:$0xff]
        %v370 = vld [vmem:[#allocation5 + $0x30] sm:$0xff]
        %v371 = vld [vmem:[#allocation5 + $0x38] sm:$0xff]
        %v372 = vld [vmem:[#allocation5 + $0x40] sm:$0xff]
        %v373 = vld [vmem:[#allocation5 + $0x48] sm:$0xff]
        %v374 = vld [vmem:[#allocation5 + $0x50] sm:$0xff]
        %v375 = vld [vmem:[#allocation5 + $0x58] sm:$0xff]
        %v376 = vld [vmem:[#allocation5 + $0x60] sm:$0xff]
        %v377 = vld [vmem:[#allocation5 + $0x68] sm:$0xff]
        %v378 = vld [vmem:[#allocation5 + $0x70] sm:$0xff]
        %v379 = vld [vmem:[#allocation5 + $0x78] sm:$0xff]
        %v380 = vld [vmem:[#allocation5 + $0x80] sm:$0xff]
        %v381 = vld [vmem:[#allocation5 + $0x88] sm:$0xff]
        %v382 = vld [vmem:[#allocation5 + $0x90] sm:$0xff]
        %v383 = vld [vmem:[#allocation5 + $0x98] sm:$0xff]
        %v384 = vld [vmem:[#allocation5 + $0xa0] sm:$0xff]
        %v385 = vld [vmem:[#allocation5 + $0xa8] sm:$0xff]
        %v386 = vld [vmem:[#allocation5 + $0xb0] sm:$0xff]
        %v387 = vld [vmem:[#allocation5 + $0xb8] sm:$0xff]
        %v388 = vld [vmem:[#allocation5 + $0xc0] sm:$0xff]
        %v389 = vld [vmem:[#allocation5 + $0xc8] sm:$0xff]
        %v390 = vld [vmem:[#allocation5 + $0xd0] sm:$0xff]
        %v391 = vld [vmem:[#allocation5 + $0xd8] sm:$0xff]
        %v392 = vld [vmem:[#allocation5 + $0xe0] sm:$0xff]
        %v393 = vld [vmem:[#allocation5 + $0xe8] sm:$0xff]
        %v394 = vld [vmem:[#allocation5 + $0xf0] sm:$0xff]
        %v395 = vld [vmem:[#allocation5 + $0xf8] sm:$0xff]
        %v396 = vld [vmem:[#allocation5 + $0x100] sm:$0xff]
        %v397 = vld [vmem:[#allocation5 + $0x108] sm:$0xff]
        %v398 = vld [vmem:[#allocation5 + $0x110] sm:$0xff]
        %v399 = vld [vmem:[#allocation5 + $0x118] sm:$0xff]
        %v400 = vld [vmem:[#allocation5 + $0x120] sm:$0xff]
        %v401 = vld [vmem:[#allocation5 + $0x128] sm:$0xff]
        %v402 = vld [vmem:[#allocation5 + $0x130] sm:$0xff]
        %v403 = vld [vmem:[#allocation5 + $0x138] sm:$0xff]
        %v404 = vld [vmem:[#allocation5 + $0x140] sm:$0xff]
        %v405 = vld [vmem:[#allocation5 + $0x148] sm:$0xff]
        %v406 = vld [vmem:[#allocation5 + $0x150] sm:$0xff]
        %v407 = vld [vmem:[#allocation5 + $0x158] sm:$0xff]
        %v408 = vld [vmem:[#allocation5 + $0x160] sm:$0xff]
        %v409 = vld [vmem:[#allocation5 + $0x168] sm:$0xff]
        %v410 = vld [vmem:[#allocation5 + $0x170] sm:$0xff]
        %v411 = vld [vmem:[#allocation5 + $0x178] sm:$0xff]
        %v412 = vld [vmem:[#allocation5 + $0x180] sm:$0xff]
        %v413 = vld [vmem:[#allocation5 + $0x188] sm:$0xff]
        %v414 = vld [vmem:[#allocation5 + $0x190] sm:$0xff]
        %v415 = vld [vmem:[#allocation5 + $0x198] sm:$0xff]
        %v416 = vld [vmem:[#allocation5 + $0x1a0] sm:$0xff]
        %v417 = vld [vmem:[#allocation5 + $0x1a8] sm:$0xff]
        %v418 = vld [vmem:[#allocation5 + $0x1b0] sm:$0xff]
        %v419 = vld [vmem:[#allocation5 + $0x1b8] sm:$0xff]
        %v420 = vld [vmem:[#allocation5 + $0x1c0] sm:$0xff]
        %v421 = vld [vmem:[#allocation5 + $0x1c8] sm:$0xff]
        %v422 = vld [vmem:[#allocation5 + $0x1d0] sm:$0xff]
        %v423 = vld [vmem:[#allocation5 + $0x1d8] sm:$0xff]
        %v424 = vld [vmem:[#allocation5 + $0x1e0] sm:$0xff]
        %v425 = vld [vmem:[#allocation5 + $0x1e8] sm:$0xff]
        %v426 = vld [vmem:[#allocation5 + $0x1f0] sm:$0xff]
        %v427 = vld [vmem:[#allocation5 + $0x1f8] sm:$0xff]
        %v428 = vld [vmem:[#allocation5 + $0x200] sm:$0xff]
        %v429 = vld [vmem:[#allocation5 + $0x208] sm:$0xff]
        %v430 = vld [vmem:[#allocation5 + $0x210] sm:$0xff]
        %v431 = vld [vmem:[#allocation5 + $0x218] sm:$0xff]
        %v432 = vld [vmem:[#allocation5 + $0x220] sm:$0xff]
        %v433 = vld [vmem:[#allocation5 + $0x228] sm:$0xff]
        %v434 = vld [vmem:[#allocation5 + $0x230] sm:$0xff]
        %v435 = vld [vmem:[#allocation5 + $0x238] sm:$0xff]
        %v436 = vld [vmem:[#allocation5 + $0x240] sm:$0xff]
        %v437 = vld [vmem:[#allocation5 + $0x248] sm:$0xff]
        %v438 = vld [vmem:[#allocation5 + $0x250] sm:$0xff]
        %v439 = vld [vmem:[#allocation5 + $0x258] sm:$0xff]
        %v440 = vld [vmem:[#allocation5 + $0x260] sm:$0xff]
        %v441 = vld [vmem:[#allocation5 + $0x268] sm:$0xff]
        %v442 = vld [vmem:[#allocation5 + $0x270] sm:$0xff]
        %v443 = vld [vmem:[#allocation5 + $0x278] sm:$0xff]
        %v444 = vld [vmem:[#allocation5 + $0x280] sm:$0xff]
        %v445 = vld [vmem:[#allocation5 + $0x288] sm:$0xff]
        %v446 = vld [vmem:[#allocation5 + $0x290] sm:$0xff]
        %v447 = vld [vmem:[#allocation5 + $0x298] sm:$0xff]
        %v448 = vld [vmem:[#allocation5 + $0x2a0] sm:$0xff]
        %v449 = vld [vmem:[#allocation5 + $0x2a8] sm:$0xff]
        %v450 = vld [vmem:[#allocation5 + $0x2b0] sm:$0xff]
        %v451 = vld [vmem:[#allocation5 + $0x2b8] sm:$0xff]
        %v452 = vld [vmem:[#allocation5 + $0x2c0] sm:$0xff]
        %v453 = vld [vmem:[#allocation5 + $0x2c8] sm:$0xff]
        %v454 = vld [vmem:[#allocation5 + $0x2d0] sm:$0xff]
        %v455 = vld [vmem:[#allocation5 + $0x2d8] sm:$0xff]
        %v456 = vld [vmem:[#allocation5 + $0x2e0] sm:$0xff]
        %v457 = vld [vmem:[#allocation5 + $0x2e8] sm:$0xff]
        %v458 = vld [vmem:[#allocation5 + $0x2f0] sm:$0xff]
        %v459 = vld [vmem:[#allocation5 + $0x2f8] sm:$0xff]
        %v460 = vld [vmem:[#allocation5 + $0x300] sm:$0xff]
        %v461 = vld [vmem:[#allocation5 + $0x308] sm:$0xff]
        %v462 = vld [vmem:[#allocation5 + $0x310] sm:$0xff]
        %v463 = vld [vmem:[#allocation5 + $0x318] sm:$0xff]
        %v464 = vld [vmem:[#allocation5 + $0x320] sm:$0xff]
        %v465 = vld [vmem:[#allocation5 + $0x328] sm:$0xff]
        %v466 = vld [vmem:[#allocation5 + $0x330] sm:$0xff]
        %v467 = vld [vmem:[#allocation5 + $0x338] sm:$0xff]
        %v468 = vld [vmem:[#allocation5 + $0x340] sm:$0xff]
        %v469 = vld [vmem:[#allocation5 + $0x348] sm:$0xff]
        %v470 = vld [vmem:[#allocation5 + $0x350] sm:$0xff]
        %v471 = vld [vmem:[#allocation5 + $0x358] sm:$0xff]
        %v472 = vld [vmem:[#allocation5 + $0x360] sm:$0xff]
        %v473 = vld [vmem:[#allocation5 + $0x368] sm:$0xff]
        %v474 = vld [vmem:[#allocation5 + $0x370] sm:$0xff]
        %v475 = vld [vmem:[#allocation5 + $0x378] sm:$0xff]
        %v476 = vld [vmem:[#allocation5 + $0x380] sm:$0xff]
        %v477 = vld [vmem:[#allocation5 + $0x388] sm:$0xff]
        %v478 = vld [vmem:[#allocation5 + $0x390] sm:$0xff]
        %v479 = vld [vmem:[#allocation5 + $0x398] sm:$0xff]
        %v480 = vld [vmem:[#allocation5 + $0x3a0] sm:$0xff]
        %v481 = vld [vmem:[#allocation5 + $0x3a8] sm:$0xff]
        %v482 = vld [vmem:[#allocation5 + $0x3b0] sm:$0xff]
        %v483 = vld [vmem:[#allocation5 + $0x3b8] sm:$0xff]
        %v484 = vld [vmem:[#allocation5 + $0x3c0] sm:$0xff]
        %v485 = vld [vmem:[#allocation5 + $0x3c8] sm:$0xff]
        %v486 = vld [vmem:[#allocation5 + $0x3d0] sm:$0xff]
        %v487 = vld [vmem:[#allocation5 + $0x3d8] sm:$0xff]
        %v488 = vld [vmem:[#allocation5 + $0x3e0] sm:$0xff]
        %v489 = vld [vmem:[#allocation5 + $0x3e8] sm:$0xff]
        %v490 = vld [vmem:[#allocation5 + $0x3f0] sm:$0xff]
        %v491 = vld [vmem:[#allocation5 + $0x3f8] sm:$0xff]
        %v492 = vld [vmem:[#allocation5 + $0x400] sm:$0xff]
        %v493 = vld [vmem:[#allocation5 + $0x408] sm:$0xff]
        %v494 = vld [vmem:[#allocation5 + $0x410] sm:$0xff]
        %v495 = vld [vmem:[#allocation5 + $0x418] sm:$0xff]
        %v496 = vld [vmem:[#allocation5 + $0x420] sm:$0xff]
        %v497 = vld [vmem:[#allocation5 + $0x428] sm:$0xff]
        %v498 = vld [vmem:[#allocation5 + $0x430] sm:$0xff]
        %v499 = vld [vmem:[#allocation5 + $0x438] sm:$0xff]
        %v500 = vld [vmem:[#allocation5 + $0x440] sm:$0xff]
        %v501 = vld [vmem:[#allocation5 + $0x448] sm:$0xff]
        %v502 = vld [vmem:[#allocation5 + $0x450] sm:$0xff]
        %v503 = vld [vmem:[#allocation5 + $0x458] sm:$0xff]
        %v504 = vld [vmem:[#allocation5 + $0x460] sm:$0xff]
        %v505 = vld [vmem:[#allocation5 + $0x468] sm:$0xff]
        %v506 = vld [vmem:[#allocation5 + $0x470] sm:$0xff]
        %v507 = vld [vmem:[#allocation5 + $0x478] sm:$0xff]
        %v508 = vld [vmem:[#allocation5 + $0x480] sm:$0xff]
        %v509 = vld [vmem:[#allocation5 + $0x488] sm:$0xff]
        %v510 = vld [vmem:[#allocation5 + $0x490] sm:$0xff]
        %v511 = vld [vmem:[#allocation5 + $0x498] sm:$0xff]
        %v512 = vld [vmem:[#allocation5 + $0x4a0] sm:$0xff]
        %v513 = vld [vmem:[#allocation5 + $0x4a8] sm:$0xff]
        %v514 = vld [vmem:[#allocation5 + $0x4b0] sm:$0xff]
        %v515 = vld [vmem:[#allocation5 + $0x4b8] sm:$0xff]
        %v516 = vld [vmem:[#allocation5 + $0x4c0] sm:$0xff]
        %v517 = vld [vmem:[#allocation5 + $0x4c8] sm:$0xff]
        %v518 = vld [vmem:[#allocation5 + $0x4d0] sm:$0xff]
        %v519 = vld [vmem:[#allocation5 + $0x4d8] sm:$0xff]
        %v520 = vld [vmem:[#allocation5 + $0x4e0] sm:$0xff]
        %v521 = vld [vmem:[#allocation5 + $0x4e8] sm:$0xff]
        %v522 = vld [vmem:[#allocation5 + $0x4f0] sm:$0xff]
        %v523 = vld [vmem:[#allocation5 + $0x4f8] sm:$0xff]
        %v524 = vld [vmem:[#allocation5 + $0x500] sm:$0xff]
        %v525 = vld [vmem:[#allocation5 + $0x508] sm:$0xff]
        %v526 = vld [vmem:[#allocation5 + $0x510] sm:$0xff]
        %v527 = vld [vmem:[#allocation5 + $0x518] sm:$0xff]
        %v528 = vld [vmem:[#allocation5 + $0x520] sm:$0xff]
        %v529 = vld [vmem:[#allocation5 + $0x528] sm:$0xff]
        %v530 = vld [vmem:[#allocation5 + $0x530] sm:$0xff]
        %v531 = vld [vmem:[#allocation5 + $0x538] sm:$0xff]
        %v532 = vld [vmem:[#allocation5 + $0x540] sm:$0xff]
        %v533 = vld [vmem:[#allocation5 + $0x548] sm:$0xff]
        %v534 = vld [vmem:[#allocation5 + $0x550] sm:$0xff]
        %v535 = vld [vmem:[#allocation5 + $0x558] sm:$0xff]
        %v536 = vld [vmem:[#allocation5 + $0x560] sm:$0xff]
        %v537 = vld [vmem:[#allocation5 + $0x568] sm:$0xff]
        %v538 = vld [vmem:[#allocation5 + $0x570] sm:$0xff]
        %v539 = vld [vmem:[#allocation5 + $0x578] sm:$0xff]
        %v540 = vld [vmem:[#allocation5 + $0x580] sm:$0xff]
        %v541 = vld [vmem:[#allocation5 + $0x588] sm:$0xff]
        %v542 = vld [vmem:[#allocation5 + $0x590] sm:$0xff]
        %v543 = vld [vmem:[#allocation5 + $0x598] sm:$0xff]
        %v544 = vld [vmem:[#allocation5 + $0x5a0] sm:$0xff]
        %v545 = vld [vmem:[#allocation5 + $0x5a8] sm:$0xff]
        %v546 = vld [vmem:[#allocation5 + $0x5b0] sm:$0xff]
        %v547 = vld [vmem:[#allocation5 + $0x5b8] sm:$0xff]
        %v548 = vld [vmem:[#allocation5 + $0x5c0] sm:$0xff]
        %v549 = vld [vmem:[#allocation5 + $0x5c8] sm:$0xff]
        %v550 = vld [vmem:[#allocation5 + $0x5d0] sm:$0xff]
        %v551 = vld [vmem:[#allocation5 + $0x5d8] sm:$0xff]
        %v552 = vld [vmem:[#allocation5 + $0x5e0] sm:$0xff]
        %v553 = vld [vmem:[#allocation5 + $0x5e8] sm:$0xff]
        %v554 = vld [vmem:[#allocation5 + $0x5f0] sm:$0xff]
        %v555 = vld [vmem:[#allocation5 + $0x5f8] sm:$0xff]
        %v556 = vld [vmem:[#allocation5 + $0x600] sm:$0x77]
        %v557 = vld [vmem:[#allocation5 + $0x608] sm:$0x77]
        %v558 = vld [vmem:[%s2] sm:$0xf]
        %v560 = vlaneseq
        %v561 = vshrl.u32 %v560, 7
        %v562 = vsub.s32 0, %v561
        %v563 = vrot.slane %v558, %v562
        %v564 = vlaneseq
        %v565 = vshrl.u32 %v564, 7
        %v566 = vsub.s32 1, %v565
        %v567 = vrot.slane %v558, %v566
        %v568 = vlaneseq
        %v569 = vshrl.u32 %v568, 7
        %v570 = vsub.s32 2, %v569
        %v571 = vrot.slane %v558, %v570
        %v572 = vlaneseq
        %v573 = vshrl.u32 %v572, 7
        %v574 = vsub.s32 3, %v573
        %v575 = vrot.slane %v558, %v574
        %v774 = vunpack.c.l.b16 %v364
        %v775 = vunpack.c.h.b16 %v364
        %v776 = vunpack.c.l.b16 %v365
        %v777 = vunpack.c.h.b16 %v365
        %v778 = vunpack.c.l.b16 %v366
        %v779 = vunpack.c.h.b16 %v366
        %v780 = vunpack.c.l.b16 %v367
        %v781 = vunpack.c.h.b16 %v367
        %v782 = vunpack.c.l.b16 %v368
        %v783 = vunpack.c.h.b16 %v368
        %v784 = vunpack.c.l.b16 %v369
        %v785 = vunpack.c.h.b16 %v369
        %v786 = vunpack.c.l.b16 %v370
        %v787 = vunpack.c.h.b16 %v370
        %v788 = vunpack.c.l.b16 %v371
        %v789 = vunpack.c.h.b16 %v371
        %v790 = vunpack.c.l.b16 %v372
        %v791 = vunpack.c.h.b16 %v372
        %v792 = vunpack.c.l.b16 %v373
        %v793 = vunpack.c.h.b16 %v373
        %v794 = vunpack.c.l.b16 %v374
        %v795 = vunpack.c.h.b16 %v374
        %v796 = vunpack.c.l.b16 %v375
        %v797 = vunpack.c.h.b16 %v375
        %v798 = vunpack.c.l.b16 %v376
        %v799 = vunpack.c.h.b16 %v376
        %v800 = vunpack.c.l.b16 %v377
        %v801 = vunpack.c.h.b16 %v377
        %v802 = vunpack.c.l.b16 %v378
        %v803 = vunpack.c.h.b16 %v378
        %v804 = vunpack.c.l.b16 %v379
        %v805 = vunpack.c.h.b16 %v379
        %v806 = vunpack.c.l.b16 %v380
        %v807 = vunpack.c.h.b16 %v380
        %v808 = vunpack.c.l.b16 %v381
        %v809 = vunpack.c.h.b16 %v381
        %v810 = vunpack.c.l.b16 %v382
        %v811 = vunpack.c.h.b16 %v382
        %v812 = vunpack.c.l.b16 %v383
        %v813 = vunpack.c.h.b16 %v383
        %v814 = vunpack.c.l.b16 %v384
        %v815 = vunpack.c.h.b16 %v384
        %v816 = vunpack.c.l.b16 %v385
        %v817 = vunpack.c.h.b16 %v385
        %v818 = vunpack.c.l.b16 %v386
        %v819 = vunpack.c.h.b16 %v386
        %v820 = vunpack.c.l.b16 %v387
        %v821 = vunpack.c.h.b16 %v387
        %v822 = vunpack.c.l.b16 %v388
        %v823 = vunpack.c.h.b16 %v388
        %v824 = vunpack.c.l.b16 %v389
        %v825 = vunpack.c.h.b16 %v389
        %v826 = vunpack.c.l.b16 %v390
        %v827 = vunpack.c.h.b16 %v390
        %v828 = vunpack.c.l.b16 %v391
        %v829 = vunpack.c.h.b16 %v391
        %v830 = vunpack.c.l.b16 %v392
        %v831 = vunpack.c.h.b16 %v392
        %v832 = vunpack.c.l.b16 %v393
        %v833 = vunpack.c.h.b16 %v393
        %v834 = vunpack.c.l.b16 %v394
        %v835 = vunpack.c.h.b16 %v394
        %v836 = vunpack.c.l.b16 %v395
        %v837 = vunpack.c.h.b16 %v395
        %v838 = vunpack.c.l.b16 %v396
        %v839 = vunpack.c.h.b16 %v396
        %v840 = vunpack.c.l.b16 %v397
        %v841 = vunpack.c.h.b16 %v397
        %v842 = vunpack.c.l.b16 %v398
        %v843 = vunpack.c.h.b16 %v398
        %v844 = vunpack.c.l.b16 %v399
        %v845 = vunpack.c.h.b16 %v399
        %v846 = vunpack.c.l.b16 %v400
        %v847 = vunpack.c.h.b16 %v400
        %v848 = vunpack.c.l.b16 %v401
        %v849 = vunpack.c.h.b16 %v401
        %v850 = vunpack.c.l.b16 %v402
        %v851 = vunpack.c.h.b16 %v402
        %v852 = vunpack.c.l.b16 %v403
        %v853 = vunpack.c.h.b16 %v403
        %v854 = vunpack.c.l.b16 %v404
        %v855 = vunpack.c.h.b16 %v404
        %v856 = vunpack.c.l.b16 %v405
        %v857 = vunpack.c.h.b16 %v405
        %v858 = vunpack.c.l.b16 %v406
        %v859 = vunpack.c.h.b16 %v406
        %v860 = vunpack.c.l.b16 %v407
        %v861 = vunpack.c.h.b16 %v407
        %v862 = vunpack.c.l.b16 %v408
        %v863 = vunpack.c.h.b16 %v408
        %v864 = vunpack.c.l.b16 %v409
        %v865 = vunpack.c.h.b16 %v409
        %v866 = vunpack.c.l.b16 %v410
        %v867 = vunpack.c.h.b16 %v410
        %v868 = vunpack.c.l.b16 %v411
        %v869 = vunpack.c.h.b16 %v411
        %v870 = vunpack.c.l.b16 %v412
        %v871 = vunpack.c.h.b16 %v412
        %v872 = vunpack.c.l.b16 %v413
        %v873 = vunpack.c.h.b16 %v413
        %v874 = vunpack.c.l.b16 %v414
        %v875 = vunpack.c.h.b16 %v414
        %v876 = vunpack.c.l.b16 %v415
        %v877 = vunpack.c.h.b16 %v415
        %v878 = vunpack.c.l.b16 %v416
        %v879 = vunpack.c.h.b16 %v416
        %v880 = vunpack.c.l.b16 %v417
        %v881 = vunpack.c.h.b16 %v417
        %v882 = vunpack.c.l.b16 %v418
        %v883 = vunpack.c.h.b16 %v418
        %v884 = vunpack.c.l.b16 %v419
        %v885 = vunpack.c.h.b16 %v419
        %v886 = vunpack.c.l.b16 %v420
        %v887 = vunpack.c.h.b16 %v420
        %v888 = vunpack.c.l.b16 %v421
        %v889 = vunpack.c.h.b16 %v421
        %v890 = vunpack.c.l.b16 %v422
        %v891 = vunpack.c.h.b16 %v422
        %v892 = vunpack.c.l.b16 %v423
        %v893 = vunpack.c.h.b16 %v423
        %v894 = vunpack.c.l.b16 %v424
        %v895 = vunpack.c.h.b16 %v424
        %v896 = vunpack.c.l.b16 %v425
        %v897 = vunpack.c.h.b16 %v425
        %v898 = vunpack.c.l.b16 %v426
        %v899 = vunpack.c.h.b16 %v426
        %v900 = vunpack.c.l.b16 %v427
        %v901 = vunpack.c.h.b16 %v427
        %v902 = vunpack.c.l.b16 %v428
        %v903 = vunpack.c.h.b16 %v428
        %v904 = vunpack.c.l.b16 %v429
        %v905 = vunpack.c.h.b16 %v429
        %v906 = vunpack.c.l.b16 %v430
        %v907 = vunpack.c.h.b16 %v430
        %v908 = vunpack.c.l.b16 %v431
        %v909 = vunpack.c.h.b16 %v431
        %v910 = vunpack.c.l.b16 %v432
        %v911 = vunpack.c.h.b16 %v432
        %v912 = vunpack.c.l.b16 %v433
        %v913 = vunpack.c.h.b16 %v433
        %v914 = vunpack.c.l.b16 %v434
        %v915 = vunpack.c.h.b16 %v434
        %v916 = vunpack.c.l.b16 %v435
        %v917 = vunpack.c.h.b16 %v435
        %v918 = vunpack.c.l.b16 %v436
        %v919 = vunpack.c.h.b16 %v436
        %v920 = vunpack.c.l.b16 %v437
        %v921 = vunpack.c.h.b16 %v437
        %v922 = vunpack.c.l.b16 %v438
        %v923 = vunpack.c.h.b16 %v438
        %v924 = vunpack.c.l.b16 %v439
        %v925 = vunpack.c.h.b16 %v439
        %v926 = vunpack.c.l.b16 %v440
        %v927 = vunpack.c.h.b16 %v440
        %v928 = vunpack.c.l.b16 %v441
        %v929 = vunpack.c.h.b16 %v441
        %v930 = vunpack.c.l.b16 %v442
        %v931 = vunpack.c.h.b16 %v442
        %v932 = vunpack.c.l.b16 %v443
        %v933 = vunpack.c.h.b16 %v443
        %v934 = vunpack.c.l.b16 %v444
        %v935 = vunpack.c.h.b16 %v444
        %v936 = vunpack.c.l.b16 %v445
        %v937 = vunpack.c.h.b16 %v445
        %v938 = vunpack.c.l.b16 %v446
        %v939 = vunpack.c.h.b16 %v446
        %v940 = vunpack.c.l.b16 %v447
        %v941 = vunpack.c.h.b16 %v447
        %v942 = vunpack.c.l.b16 %v448
        %v943 = vunpack.c.h.b16 %v448
        %v944 = vunpack.c.l.b16 %v449
        %v945 = vunpack.c.h.b16 %v449
        %v946 = vunpack.c.l.b16 %v450
        %v947 = vunpack.c.h.b16 %v450
        %v948 = vunpack.c.l.b16 %v451
        %v949 = vunpack.c.h.b16 %v451
        %v950 = vunpack.c.l.b16 %v452
        %v951 = vunpack.c.h.b16 %v452
        %v952 = vunpack.c.l.b16 %v453
        %v953 = vunpack.c.h.b16 %v453
        %v954 = vunpack.c.l.b16 %v454
        %v955 = vunpack.c.h.b16 %v454
        %v956 = vunpack.c.l.b16 %v455
        %v957 = vunpack.c.h.b16 %v455
        %v958 = vunpack.c.l.b16 %v456
        %v959 = vunpack.c.h.b16 %v456
        %v960 = vunpack.c.l.b16 %v457
        %v961 = vunpack.c.h.b16 %v457
        %v962 = vunpack.c.l.b16 %v458
        %v963 = vunpack.c.h.b16 %v458
        %v964 = vunpack.c.l.b16 %v459
        %v965 = vunpack.c.h.b16 %v459
        %v966 = vunpack.c.l.b16 %v460
        %v967 = vunpack.c.h.b16 %v460
        %v968 = vunpack.c.l.b16 %v461
        %v969 = vunpack.c.h.b16 %v461
        %v970 = vunpack.c.l.b16 %v462
        %v971 = vunpack.c.h.b16 %v462
        %v972 = vunpack.c.l.b16 %v463
        %v973 = vunpack.c.h.b16 %v463
        %v974 = vunpack.c.l.b16 %v464
        %v975 = vunpack.c.h.b16 %v464
        %v976 = vunpack.c.l.b16 %v465
        %v977 = vunpack.c.h.b16 %v465
        %v978 = vunpack.c.l.b16 %v466
        %v979 = vunpack.c.h.b16 %v466
        %v980 = vunpack.c.l.b16 %v467
        %v981 = vunpack.c.h.b16 %v467
        %v982 = vunpack.c.l.b16 %v468
        %v983 = vunpack.c.h.b16 %v468
        %v984 = vunpack.c.l.b16 %v469
        %v985 = vunpack.c.h.b16 %v469
        %v986 = vunpack.c.l.b16 %v470
        %v987 = vunpack.c.h.b16 %v470
        %v988 = vunpack.c.l.b16 %v471
        %v989 = vunpack.c.h.b16 %v471
        %v990 = vunpack.c.l.b16 %v472
        %v991 = vunpack.c.h.b16 %v472
        %v992 = vunpack.c.l.b16 %v473
        %v993 = vunpack.c.h.b16 %v473
        %v994 = vunpack.c.l.b16 %v474
        %v995 = vunpack.c.h.b16 %v474
        %v996 = vunpack.c.l.b16 %v475
        %v997 = vunpack.c.h.b16 %v475
        %v998 = vunpack.c.l.b16 %v476
        %v999 = vunpack.c.h.b16 %v476
        %v1000 = vunpack.c.l.b16 %v477
        %v1001 = vunpack.c.h.b16 %v477
        %v1002 = vunpack.c.l.b16 %v478
        %v1003 = vunpack.c.h.b16 %v478
        %v1004 = vunpack.c.l.b16 %v479
        %v1005 = vunpack.c.h.b16 %v479
        %v1006 = vunpack.c.l.b16 %v480
        %v1007 = vunpack.c.h.b16 %v480
        %v1008 = vunpack.c.l.b16 %v481
        %v1009 = vunpack.c.h.b16 %v481
        %v1010 = vunpack.c.l.b16 %v482
        %v1011 = vunpack.c.h.b16 %v482
        %v1012 = vunpack.c.l.b16 %v483
        %v1013 = vunpack.c.h.b16 %v483
        %v1014 = vunpack.c.l.b16 %v484
        %v1015 = vunpack.c.h.b16 %v484
        %v1016 = vunpack.c.l.b16 %v485
        %v1017 = vunpack.c.h.b16 %v485
        %v1018 = vunpack.c.l.b16 %v486
        %v1019 = vunpack.c.h.b16 %v486
        %v1020 = vunpack.c.l.b16 %v487
        %v1021 = vunpack.c.h.b16 %v487
        %v1022 = vunpack.c.l.b16 %v488
        %v1023 = vunpack.c.h.b16 %v488
        %v1024 = vunpack.c.l.b16 %v489
        %v1025 = vunpack.c.h.b16 %v489
        %v1026 = vunpack.c.l.b16 %v490
        %v1027 = vunpack.c.h.b16 %v490
        %v1028 = vunpack.c.l.b16 %v491
        %v1029 = vunpack.c.h.b16 %v491
        %v1030 = vunpack.c.l.b16 %v492
        %v1031 = vunpack.c.h.b16 %v492
        %v1032 = vunpack.c.l.b16 %v493
        %v1033 = vunpack.c.h.b16 %v493
        %v1034 = vunpack.c.l.b16 %v494
        %v1035 = vunpack.c.h.b16 %v494
        %v1036 = vunpack.c.l.b16 %v495
        %v1037 = vunpack.c.h.b16 %v495
        %v1038 = vunpack.c.l.b16 %v496
        %v1039 = vunpack.c.h.b16 %v496
        %v1040 = vunpack.c.l.b16 %v497
        %v1041 = vunpack.c.h.b16 %v497
        %v1042 = vunpack.c.l.b16 %v498
        %v1043 = vunpack.c.h.b16 %v498
        %v1044 = vunpack.c.l.b16 %v499
        %v1045 = vunpack.c.h.b16 %v499
        %v1046 = vunpack.c.l.b16 %v500
        %v1047 = vunpack.c.h.b16 %v500
        %v1048 = vunpack.c.l.b16 %v501
        %v1049 = vunpack.c.h.b16 %v501
        %v1050 = vunpack.c.l.b16 %v502
        %v1051 = vunpack.c.h.b16 %v502
        %v1052 = vunpack.c.l.b16 %v503
        %v1053 = vunpack.c.h.b16 %v503
        %v1054 = vunpack.c.l.b16 %v504
        %v1055 = vunpack.c.h.b16 %v504
        %v1056 = vunpack.c.l.b16 %v505
        %v1057 = vunpack.c.h.b16 %v505
        %v1058 = vunpack.c.l.b16 %v506
        %v1059 = vunpack.c.h.b16 %v506
        %v1060 = vunpack.c.l.b16 %v507
        %v1061 = vunpack.c.h.b16 %v507
        %v1062 = vunpack.c.l.b16 %v508
        %v1063 = vunpack.c.h.b16 %v508
        %v1064 = vunpack.c.l.b16 %v509
        %v1065 = vunpack.c.h.b16 %v509
        %v1066 = vunpack.c.l.b16 %v510
        %v1067 = vunpack.c.h.b16 %v510
        %v1068 = vunpack.c.l.b16 %v511
        %v1069 = vunpack.c.h.b16 %v511
        %v1070 = vunpack.c.l.b16 %v512
        %v1071 = vunpack.c.h.b16 %v512
        %v1072 = vunpack.c.l.b16 %v513
        %v1073 = vunpack.c.h.b16 %v513
        %v1074 = vunpack.c.l.b16 %v514
        %v1075 = vunpack.c.h.b16 %v514
        %v1076 = vunpack.c.l.b16 %v515
        %v1077 = vunpack.c.h.b16 %v515
        %v1078 = vunpack.c.l.b16 %v516
        %v1079 = vunpack.c.h.b16 %v516
        %v1080 = vunpack.c.l.b16 %v517
        %v1081 = vunpack.c.h.b16 %v517
        %v1082 = vunpack.c.l.b16 %v518
        %v1083 = vunpack.c.h.b16 %v518
        %v1084 = vunpack.c.l.b16 %v519
        %v1085 = vunpack.c.h.b16 %v519
        %v1086 = vunpack.c.l.b16 %v520
        %v1087 = vunpack.c.h.b16 %v520
        %v1088 = vunpack.c.l.b16 %v521
        %v1089 = vunpack.c.h.b16 %v521
        %v1090 = vunpack.c.l.b16 %v522
        %v1091 = vunpack.c.h.b16 %v522
        %v1092 = vunpack.c.l.b16 %v523
        %v1093 = vunpack.c.h.b16 %v523
        %v1094 = vunpack.c.l.b16 %v524
        %v1095 = vunpack.c.h.b16 %v524
        %v1096 = vunpack.c.l.b16 %v525
        %v1097 = vunpack.c.h.b16 %v525
        %v1098 = vunpack.c.l.b16 %v526
        %v1099 = vunpack.c.h.b16 %v526
        %v1100 = vunpack.c.l.b16 %v527
        %v1101 = vunpack.c.h.b16 %v527
        %v1102 = vunpack.c.l.b16 %v528
        %v1103 = vunpack.c.h.b16 %v528
        %v1104 = vunpack.c.l.b16 %v529
        %v1105 = vunpack.c.h.b16 %v529
        %v1106 = vunpack.c.l.b16 %v530
        %v1107 = vunpack.c.h.b16 %v530
        %v1108 = vunpack.c.l.b16 %v531
        %v1109 = vunpack.c.h.b16 %v531
        %v1110 = vunpack.c.l.b16 %v532
        %v1111 = vunpack.c.h.b16 %v532
        %v1112 = vunpack.c.l.b16 %v533
        %v1113 = vunpack.c.h.b16 %v533
        %v1114 = vunpack.c.l.b16 %v534
        %v1115 = vunpack.c.h.b16 %v534
        %v1116 = vunpack.c.l.b16 %v535
        %v1117 = vunpack.c.h.b16 %v535
        %v1118 = vunpack.c.l.b16 %v536
        %v1119 = vunpack.c.h.b16 %v536
        %v1120 = vunpack.c.l.b16 %v537
        %v1121 = vunpack.c.h.b16 %v537
        %v1122 = vunpack.c.l.b16 %v538
        %v1123 = vunpack.c.h.b16 %v538
        %v1124 = vunpack.c.l.b16 %v539
        %v1125 = vunpack.c.h.b16 %v539
        %v1126 = vunpack.c.l.b16 %v540
        %v1127 = vunpack.c.h.b16 %v540
        %v1128 = vunpack.c.l.b16 %v541
        %v1129 = vunpack.c.h.b16 %v541
        %v1130 = vunpack.c.l.b16 %v542
        %v1131 = vunpack.c.h.b16 %v542
        %v1132 = vunpack.c.l.b16 %v543
        %v1133 = vunpack.c.h.b16 %v543
        %v1134 = vunpack.c.l.b16 %v544
        %v1135 = vunpack.c.h.b16 %v544
        %v1136 = vunpack.c.l.b16 %v545
        %v1137 = vunpack.c.h.b16 %v545
        %v1138 = vunpack.c.l.b16 %v546
        %v1139 = vunpack.c.h.b16 %v546
        %v1140 = vunpack.c.l.b16 %v547
        %v1141 = vunpack.c.h.b16 %v547
        %v1142 = vunpack.c.l.b16 %v548
        %v1143 = vunpack.c.h.b16 %v548
        %v1144 = vunpack.c.l.b16 %v549
        %v1145 = vunpack.c.h.b16 %v549
        %v1146 = vunpack.c.l.b16 %v550
        %v1147 = vunpack.c.h.b16 %v550
        %v1148 = vunpack.c.l.b16 %v551
        %v1149 = vunpack.c.h.b16 %v551
        %v1150 = vunpack.c.l.b16 %v552
        %v1151 = vunpack.c.h.b16 %v552
        %v1152 = vunpack.c.l.b16 %v553
        %v1153 = vunpack.c.h.b16 %v553
        %v1154 = vunpack.c.l.b16 %v554
        %v1155 = vunpack.c.h.b16 %v554
        %v1156 = vunpack.c.l.b16 %v555
        %v1157 = vunpack.c.h.b16 %v555
        %v1158 = vunpack.c.l.b16 %v556
        %v1159 = vunpack.c.h.b16 %v556
        %v1160 = vunpack.c.l.b16 %v557
        %v1161 = vunpack.c.h.b16 %v557
        %v1162 = vpack.c.b16 %v778, %v774
        %v1163 = vpack.c.b16 %v779, %v775
        %v1164 = vpack.c.b16 %v780, %v776
        %v1165 = vpack.c.b16 %v781, %v777
        %v1166 = vpack.c.b16 %v786, %v782
        %v1167 = vpack.c.b16 %v787, %v783
        %v1168 = vpack.c.b16 %v788, %v784
        %v1169 = vpack.c.b16 %v789, %v785
        %v1170 = vpack.c.b16 %v794, %v790
        %v1171 = vpack.c.b16 %v795, %v791
        %v1172 = vpack.c.b16 %v796, %v792
        %v1173 = vpack.c.b16 %v797, %v793
        %v1174 = vpack.c.b16 %v802, %v798
        %v1175 = vpack.c.b16 %v803, %v799
        %v1176 = vpack.c.b16 %v804, %v800
        %v1177 = vpack.c.b16 %v805, %v801
        %v1178 = vpack.c.b16 %v810, %v806
        %v1179 = vpack.c.b16 %v811, %v807
        %v1180 = vpack.c.b16 %v812, %v808
        %v1181 = vpack.c.b16 %v813, %v809
        %v1182 = vpack.c.b16 %v818, %v814
        %v1183 = vpack.c.b16 %v819, %v815
        %v1184 = vpack.c.b16 %v820, %v816
        %v1185 = vpack.c.b16 %v821, %v817
        %v1186 = vpack.c.b16 %v826, %v822
        %v1187 = vpack.c.b16 %v827, %v823
        %v1188 = vpack.c.b16 %v828, %v824
        %v1189 = vpack.c.b16 %v829, %v825
        %v1190 = vpack.c.b16 %v834, %v830
        %v1191 = vpack.c.b16 %v835, %v831
        %v1192 = vpack.c.b16 %v836, %v832
        %v1193 = vpack.c.b16 %v837, %v833
        %v1194 = vpack.c.b16 %v842, %v838
        %v1195 = vpack.c.b16 %v843, %v839
        %v1196 = vpack.c.b16 %v844, %v840
        %v1197 = vpack.c.b16 %v845, %v841
        %v1198 = vpack.c.b16 %v850, %v846
        %v1199 = vpack.c.b16 %v851, %v847
        %v1200 = vpack.c.b16 %v852, %v848
        %v1201 = vpack.c.b16 %v853, %v849
        %v1202 = vpack.c.b16 %v858, %v854
        %v1203 = vpack.c.b16 %v859, %v855
        %v1204 = vpack.c.b16 %v860, %v856
        %v1205 = vpack.c.b16 %v861, %v857
        %v1206 = vpack.c.b16 %v866, %v862
        %v1207 = vpack.c.b16 %v867, %v863
        %v1208 = vpack.c.b16 %v868, %v864
        %v1209 = vpack.c.b16 %v869, %v865
        %v1210 = vpack.c.b16 %v874, %v870
        %v1211 = vpack.c.b16 %v875, %v871
        %v1212 = vpack.c.b16 %v876, %v872
        %v1213 = vpack.c.b16 %v877, %v873
        %v1214 = vpack.c.b16 %v882, %v878
        %v1215 = vpack.c.b16 %v883, %v879
        %v1216 = vpack.c.b16 %v884, %v880
        %v1217 = vpack.c.b16 %v885, %v881
        %v1218 = vpack.c.b16 %v890, %v886
        %v1219 = vpack.c.b16 %v891, %v887
        %v1220 = vpack.c.b16 %v892, %v888
        %v1221 = vpack.c.b16 %v893, %v889
        %v1222 = vpack.c.b16 %v898, %v894
        %v1223 = vpack.c.b16 %v899, %v895
        %v1224 = vpack.c.b16 %v900, %v896
        %v1225 = vpack.c.b16 %v901, %v897
        %v1226 = vpack.c.b16 %v906, %v902
        %v1227 = vpack.c.b16 %v907, %v903
        %v1228 = vpack.c.b16 %v908, %v904
        %v1229 = vpack.c.b16 %v909, %v905
        %v1230 = vpack.c.b16 %v914, %v910
        %v1231 = vpack.c.b16 %v915, %v911
        %v1232 = vpack.c.b16 %v916, %v912
        %v1233 = vpack.c.b16 %v917, %v913
        %v1234 = vpack.c.b16 %v922, %v918
        %v1235 = vpack.c.b16 %v923, %v919
        %v1236 = vpack.c.b16 %v924, %v920
        %v1237 = vpack.c.b16 %v925, %v921
        %v1238 = vpack.c.b16 %v930, %v926
        %v1239 = vpack.c.b16 %v931, %v927
        %v1240 = vpack.c.b16 %v932, %v928
        %v1241 = vpack.c.b16 %v933, %v929
        %v1242 = vpack.c.b16 %v938, %v934
        %v1243 = vpack.c.b16 %v939, %v935
        %v1244 = vpack.c.b16 %v940, %v936
        %v1245 = vpack.c.b16 %v941, %v937
        %v1246 = vpack.c.b16 %v946, %v942
        %v1247 = vpack.c.b16 %v947, %v943
        %v1248 = vpack.c.b16 %v948, %v944
        %v1249 = vpack.c.b16 %v949, %v945
        %v1250 = vpack.c.b16 %v954, %v950
        %v1251 = vpack.c.b16 %v955, %v951
        %v1252 = vpack.c.b16 %v956, %v952
        %v1253 = vpack.c.b16 %v957, %v953
        %v1254 = vpack.c.b16 %v962, %v958
        %v1255 = vpack.c.b16 %v963, %v959
        %v1256 = vpack.c.b16 %v964, %v960
        %v1257 = vpack.c.b16 %v965, %v961
        %v1258 = vpack.c.b16 %v970, %v966
        %v1259 = vpack.c.b16 %v971, %v967
        %v1260 = vpack.c.b16 %v972, %v968
        %v1261 = vpack.c.b16 %v973, %v969
        %v1262 = vpack.c.b16 %v978, %v974
        %v1263 = vpack.c.b16 %v979, %v975
        %v1264 = vpack.c.b16 %v980, %v976
        %v1265 = vpack.c.b16 %v981, %v977
        %v1266 = vpack.c.b16 %v986, %v982
        %v1267 = vpack.c.b16 %v987, %v983
        %v1268 = vpack.c.b16 %v988, %v984
        %v1269 = vpack.c.b16 %v989, %v985
        %v1270 = vpack.c.b16 %v994, %v990
        %v1271 = vpack.c.b16 %v995, %v991
        %v1272 = vpack.c.b16 %v996, %v992
        %v1273 = vpack.c.b16 %v997, %v993
        %v1274 = vpack.c.b16 %v1002, %v998
        %v1275 = vpack.c.b16 %v1003, %v999
        %v1276 = vpack.c.b16 %v1004, %v1000
        %v1277 = vpack.c.b16 %v1005, %v1001
        %v1278 = vpack.c.b16 %v1010, %v1006
        %v1279 = vpack.c.b16 %v1011, %v1007
        %v1280 = vpack.c.b16 %v1012, %v1008
        %v1281 = vpack.c.b16 %v1013, %v1009
        %v1282 = vpack.c.b16 %v1018, %v1014
        %v1283 = vpack.c.b16 %v1019, %v1015
        %v1284 = vpack.c.b16 %v1020, %v1016
        %v1285 = vpack.c.b16 %v1021, %v1017
        %v1286 = vpack.c.b16 %v1026, %v1022
        %v1287 = vpack.c.b16 %v1027, %v1023
        %v1288 = vpack.c.b16 %v1028, %v1024
        %v1289 = vpack.c.b16 %v1029, %v1025
        %v1290 = vpack.c.b16 %v1034, %v1030
        %v1291 = vpack.c.b16 %v1035, %v1031
        %v1292 = vpack.c.b16 %v1036, %v1032
        %v1293 = vpack.c.b16 %v1037, %v1033
        %v1294 = vpack.c.b16 %v1042, %v1038
        %v1295 = vpack.c.b16 %v1043, %v1039
        %v1296 = vpack.c.b16 %v1044, %v1040
        %v1297 = vpack.c.b16 %v1045, %v1041
        %v1298 = vpack.c.b16 %v1050, %v1046
        %v1299 = vpack.c.b16 %v1051, %v1047
        %v1300 = vpack.c.b16 %v1052, %v1048
        %v1301 = vpack.c.b16 %v1053, %v1049
        %v1302 = vpack.c.b16 %v1058, %v1054
        %v1303 = vpack.c.b16 %v1059, %v1055
        %v1304 = vpack.c.b16 %v1060, %v1056
        %v1305 = vpack.c.b16 %v1061, %v1057
        %v1306 = vpack.c.b16 %v1066, %v1062
        %v1307 = vpack.c.b16 %v1067, %v1063
        %v1308 = vpack.c.b16 %v1068, %v1064
        %v1309 = vpack.c.b16 %v1069, %v1065
        %v1310 = vpack.c.b16 %v1074, %v1070
        %v1311 = vpack.c.b16 %v1075, %v1071
        %v1312 = vpack.c.b16 %v1076, %v1072
        %v1313 = vpack.c.b16 %v1077, %v1073
        %v1314 = vpack.c.b16 %v1082, %v1078
        %v1315 = vpack.c.b16 %v1083, %v1079
        %v1316 = vpack.c.b16 %v1084, %v1080
        %v1317 = vpack.c.b16 %v1085, %v1081
        %v1318 = vpack.c.b16 %v1090, %v1086
        %v1319 = vpack.c.b16 %v1091, %v1087
        %v1320 = vpack.c.b16 %v1092, %v1088
        %v1321 = vpack.c.b16 %v1093, %v1089
        %v1322 = vpack.c.b16 %v1098, %v1094
        %v1323 = vpack.c.b16 %v1099, %v1095
        %v1324 = vpack.c.b16 %v1100, %v1096
        %v1325 = vpack.c.b16 %v1101, %v1097
        %v1326 = vpack.c.b16 %v1106, %v1102
        %v1327 = vpack.c.b16 %v1107, %v1103
        %v1328 = vpack.c.b16 %v1108, %v1104
        %v1329 = vpack.c.b16 %v1109, %v1105
        %v1330 = vpack.c.b16 %v1114, %v1110
        %v1331 = vpack.c.b16 %v1115, %v1111
        %v1332 = vpack.c.b16 %v1116, %v1112
        %v1333 = vpack.c.b16 %v1117, %v1113
        %v1334 = vpack.c.b16 %v1122, %v1118
        %v1335 = vpack.c.b16 %v1123, %v1119
        %v1336 = vpack.c.b16 %v1124, %v1120
        %v1337 = vpack.c.b16 %v1125, %v1121
        %v1338 = vpack.c.b16 %v1130, %v1126
        %v1339 = vpack.c.b16 %v1131, %v1127
        %v1340 = vpack.c.b16 %v1132, %v1128
        %v1341 = vpack.c.b16 %v1133, %v1129
        %v1342 = vpack.c.b16 %v1138, %v1134
        %v1343 = vpack.c.b16 %v1139, %v1135
        %v1344 = vpack.c.b16 %v1140, %v1136
        %v1345 = vpack.c.b16 %v1141, %v1137
        %v1346 = vpack.c.b16 %v1146, %v1142
        %v1347 = vpack.c.b16 %v1147, %v1143
        %v1348 = vpack.c.b16 %v1148, %v1144
        %v1349 = vpack.c.b16 %v1149, %v1145
        %v1350 = vpack.c.b16 %v1154, %v1150
        %v1351 = vpack.c.b16 %v1155, %v1151
        %v1352 = vpack.c.b16 %v1156, %v1152
        %v1353 = vpack.c.b16 %v1157, %v1153
        %v1354 = vpack.c.b16 %v1158, %v1158
        %v1355 = vpack.c.b16 %v1159, %v1159
        %v1356 = vpack.c.b16 %v1160, %v1160
        %v1357 = vpack.c.b16 %v1161, %v1161
        %vm1550 = vcmask 39936
        %v1552 = vsel %vm1550, %v363, 0
        %vm1554 = vcmask 1041408
        %vm1555 = vcmask 1042432
        %v1556 = vsel %vm1554, 4294967295, 65535
        %v1557 = vsel %vm1555, %v1556, 0
        %v1559 = vand.u32 %v1354, %v1557
        %v1562 = vand.u32 %v1355, %v1557
        %v1565 = vand.u32 %v1356, %v1557
        %v1568 = vand.u32 %v1357, %v1557
        %1570 = vmatprep.subr.bf16.mxu0 %v1191
        %1571 = vmatpush1.bf16.msra.mxu0 %v1190
        %1572 = vmatprep.subr.bf16.mxu0 %v1187
        %1573 = vmatpush1.bf16.msra.mxu0 %v1186
        %1574 = vmatprep.subr.bf16.mxu0 %v1183
        %1575 = vmatpush1.bf16.msra.mxu0 %v1182
        %1576 = vmatprep.subr.bf16.mxu0 %v1179
        %1577 = vmatpush1.bf16.msra.mxu0 %v1178
        %1578 = vmatprep.subr.bf16.mxu0 %v1175
        %1579 = vmatpush1.bf16.msra.mxu0 %v1174
        %1580 = vmatprep.subr.bf16.mxu0 %v1171
        %1581 = vmatpush1.bf16.msra.mxu0 %v1170
        %1582 = vmatprep.subr.bf16.mxu0 %v1167
        %1583 = vmatpush1.bf16.msra.mxu0 %v1166
        %1584 = vmatprep.subr.bf16.mxu0 %v1163
        %1585 = vmatpush1.bf16.msra.mxu0 %v1162
        %1586 = vmatprep.subr.bf16.mxu0 %v1223
        %1587 = vmatpush2.bf16.msra.mxu0 %v1222
        %1588 = vmatprep.subr.bf16.mxu0 %v1219
        %1589 = vmatpush2.bf16.msra.mxu0 %v1218
        %1590 = vmatprep.subr.bf16.mxu0 %v1215
        %1591 = vmatpush2.bf16.msra.mxu0 %v1214
        %1592 = vmatprep.subr.bf16.mxu0 %v1211
        %1593 = vmatpush2.bf16.msra.mxu0 %v1210
        %1594 = vmatprep.subr.bf16.mxu0 %v1207
        %1595 = vmatpush2.bf16.msra.mxu0 %v1206
        %1596 = vmatprep.subr.bf16.mxu0 %v1203
        %1597 = vmatpush2.bf16.msra.mxu0 %v1202
        %1598 = vmatprep.subr.bf16.mxu0 %v1199
        %1599 = vmatpush2.bf16.msra.mxu0 %v1198
        %1600 = vmatprep.subr.bf16.mxu0 %v1195
        %1601 = vmatpush2.bf16.msra.mxu0 %v1194
        %1602 = vmatprep.mubr.bf16.mxu0 %v358
        %1603 = vmatmul.mubr.bf16.gmra.mxu0 %v357
        %v1604 = vpop.f32.mrf.mxu0
        %v1605 = vadd.f32 %v563, %v1604
        %v1606 = vpop.f32.mrf.mxu0
        %v1607 = vadd.f32 %v567, %v1606
        %v1608 = vpop.f32.mrf.mxu0
        %v1609 = vadd.f32 %v563, %v1608
        %v1610 = vpop.f32.mrf.mxu0
        %v1611 = vadd.f32 %v567, %v1610
        %1612 = vdwg.mxu0
        %1613 = vmatprep.subr.bf16.mxu0 %v1255
        %1614 = vmatpush1.bf16.msra.mxu0 %v1254
        %1615 = vmatprep.subr.bf16.mxu0 %v1251
        %1616 = vmatpush1.bf16.msra.mxu0 %v1250
        %1617 = vmatprep.subr.bf16.mxu0 %v1247
        %1618 = vmatpush1.bf16.msra.mxu0 %v1246
        %1619 = vmatprep.subr.bf16.mxu0 %v1243
        %1620 = vmatpush1.bf16.msra.mxu0 %v1242
        %1621 = vmatprep.subr.bf16.mxu0 %v1239
        %1622 = vmatpush1.bf16.msra.mxu0 %v1238
        %1623 = vmatprep.subr.bf16.mxu0 %v1235
        %1624 = vmatpush1.bf16.msra.mxu0 %v1234
        %1625 = vmatprep.subr.bf16.mxu0 %v1231
        %1626 = vmatpush1.bf16.msra.mxu0 %v1230
        %1627 = vmatprep.subr.bf16.mxu0 %v1227
        %1628 = vmatpush1.bf16.msra.mxu0 %v1226
        %1629 = vmatprep.subr.bf16.mxu0 %v1287
        %1630 = vmatpush2.bf16.msra.mxu0 %v1286
        %1631 = vmatprep.subr.bf16.mxu0 %v1283
        %1632 = vmatpush2.bf16.msra.mxu0 %v1282
        %1633 = vmatprep.subr.bf16.mxu0 %v1279
        %1634 = vmatpush2.bf16.msra.mxu0 %v1278
        %1635 = vmatprep.subr.bf16.mxu0 %v1275
        %1636 = vmatpush2.bf16.msra.mxu0 %v1274
        %1637 = vmatprep.subr.bf16.mxu0 %v1271
        %1638 = vmatpush2.bf16.msra.mxu0 %v1270
        %1639 = vmatprep.subr.bf16.mxu0 %v1267
        %1640 = vmatpush2.bf16.msra.mxu0 %v1266
        %1641 = vmatprep.subr.bf16.mxu0 %v1263
        %1642 = vmatpush2.bf16.msra.mxu0 %v1262
        %1643 = vmatprep.subr.bf16.mxu0 %v1259
        %1644 = vmatpush2.bf16.msra.mxu0 %v1258
        %1645 = vmatprep.mubr.bf16.mxu0 %v360
        %1646 = vmatmul.mubr.bf16.gmra.mxu0 %v359
        %v1647 = vpop.f32.mrf.mxu0
        %v1648 = vadd.f32 %v1605, %v1647
        %v1649 = vpop.f32.mrf.mxu0
        %v1650 = vadd.f32 %v1607, %v1649
        %v1651 = vpop.f32.mrf.mxu0
        %v1652 = vadd.f32 %v1609, %v1651
        %v1653 = vpop.f32.mrf.mxu0
        %v1654 = vadd.f32 %v1611, %v1653
        %1655 = vdwg.mxu0
        %1656 = vmatprep.subr.bf16.mxu0 %v1319
        %1657 = vmatpush1.bf16.msra.mxu0 %v1318
        %1658 = vmatprep.subr.bf16.mxu0 %v1315
        %1659 = vmatpush1.bf16.msra.mxu0 %v1314
        %1660 = vmatprep.subr.bf16.mxu0 %v1311
        %1661 = vmatpush1.bf16.msra.mxu0 %v1310
        %1662 = vmatprep.subr.bf16.mxu0 %v1307
        %1663 = vmatpush1.bf16.msra.mxu0 %v1306
        %1664 = vmatprep.subr.bf16.mxu0 %v1303
        %1665 = vmatpush1.bf16.msra.mxu0 %v1302
        %1666 = vmatprep.subr.bf16.mxu0 %v1299
        %1667 = vmatpush1.bf16.msra.mxu0 %v1298
        %1668 = vmatprep.subr.bf16.mxu0 %v1295
        %1669 = vmatpush1.bf16.msra.mxu0 %v1294
        %1670 = vmatprep.subr.bf16.mxu0 %v1291
        %1671 = vmatpush1.bf16.msra.mxu0 %v1290
        %1672 = vmatprep.subr.bf16.mxu0 %v1351
        %1673 = vmatpush2.bf16.msra.mxu0 %v1350
        %1674 = vmatprep.subr.bf16.mxu0 %v1347
        %1675 = vmatpush2.bf16.msra.mxu0 %v1346
        %1676 = vmatprep.subr.bf16.mxu0 %v1343
        %1677 = vmatpush2.bf16.msra.mxu0 %v1342
        %1678 = vmatprep.subr.bf16.mxu0 %v1339
        %1679 = vmatpush2.bf16.msra.mxu0 %v1338
        %1680 = vmatprep.subr.bf16.mxu0 %v1335
        %1681 = vmatpush2.bf16.msra.mxu0 %v1334
        %1682 = vmatprep.subr.bf16.mxu0 %v1331
        %1683 = vmatpush2.bf16.msra.mxu0 %v1330
        %1684 = vmatprep.subr.bf16.mxu0 %v1327
        %1685 = vmatpush2.bf16.msra.mxu0 %v1326
        %1686 = vmatprep.subr.bf16.mxu0 %v1323
        %1687 = vmatpush2.bf16.msra.mxu0 %v1322
        %1688 = vmatprep.mubr.bf16.mxu0 %v362
        %1689 = vmatmul.mubr.bf16.gmra.mxu0 %v361
        %v1690 = vpop.f32.mrf.mxu0
        %v1691 = vadd.f32 %v1648, %v1690
        %v1692 = vpop.f32.mrf.mxu0
        %v1693 = vadd.f32 %v1650, %v1692
        %v1694 = vpop.f32.mrf.mxu0
        %v1695 = vadd.f32 %v1652, %v1694
        %v1696 = vpop.f32.mrf.mxu0
        %v1697 = vadd.f32 %v1654, %v1696
        %1698 = vdwg.mxu0
        %1699 = vmatprep.subr.bf16.mxu0 0
        %1700 = vmatpush1.bf16.msra.mxu0 0
        %1701 = vmatprep.subr.bf16.mxu0 0
        %1702 = vmatpush1.bf16.msra.mxu0 0
        %1703 = vmatprep.subr.bf16.mxu0 0
        %1704 = vmatpush1.bf16.msra.mxu0 0
        %1705 = vmatprep.subr.bf16.mxu0 0
        %1706 = vmatpush1.bf16.msra.mxu0 0
        %1707 = vmatprep.subr.bf16.mxu0 0
        %1708 = vmatpush1.bf16.msra.mxu0 0
        %1709 = vmatprep.subr.bf16.mxu0 0
        %1710 = vmatpush1.bf16.msra.mxu0 0
        %1711 = vmatprep.subr.bf16.mxu0 0
        %1712 = vmatpush1.bf16.msra.mxu0 0
        %1713 = vmatprep.subr.bf16.mxu0 %v1562
        %1714 = vmatpush1.bf16.msra.mxu0 %v1559
        %1715 = vmatprep.subr.bf16.mxu0 0
        %1716 = vmatpush2.bf16.msra.mxu0 0
        %1717 = vmatprep.subr.bf16.mxu0 0
        %1718 = vmatpush2.bf16.msra.mxu0 0
        %1719 = vmatprep.subr.bf16.mxu0 0
        %1720 = vmatpush2.bf16.msra.mxu0 0
        %1721 = vmatprep.subr.bf16.mxu0 0
        %1722 = vmatpush2.bf16.msra.mxu0 0
        %1723 = vmatprep.subr.bf16.mxu0 0
        %1724 = vmatpush2.bf16.msra.mxu0 0
        %1725 = vmatprep.subr.bf16.mxu0 0
        %1726 = vmatpush2.bf16.msra.mxu0 0
        %1727 = vmatprep.subr.bf16.mxu0 0
        %1728 = vmatpush2.bf16.msra.mxu0 0
        %1729 = vmatprep.subr.bf16.mxu0 0
        %1730 = vmatpush2.bf16.msra.mxu0 0
        %1731 = vmatprep.mubr.bf16.mxu0 0
        %1732 = vmatmul.mubr.bf16.gmra.mxu0 %v1552
        %v1733 = vpop.f32.mrf.mxu0
        %v1734 = vadd.f32 %v1691, %v1733
        %v1735 = vpop.f32.mrf.mxu0
        %v1736 = vadd.f32 %v1693, %v1735
        %v1737 = vpop.f32.mrf.mxu0
        %v1738 = vadd.f32 %v1695, %v1737
        %v1739 = vpop.f32.mrf.mxu0
        %v1740 = vadd.f32 %v1697, %v1739
        %1741 = vdwg.mxu0
        %1742 = vmatprep.subr.bf16.mxu0 %v1193
        %1743 = vmatpush1.bf16.msra.mxu0 %v1192
        %1744 = vmatprep.subr.bf16.mxu0 %v1189
        %1745 = vmatpush1.bf16.msra.mxu0 %v1188
        %1746 = vmatprep.subr.bf16.mxu0 %v1185
        %1747 = vmatpush1.bf16.msra.mxu0 %v1184
        %1748 = vmatprep.subr.bf16.mxu0 %v1181
        %1749 = vmatpush1.bf16.msra.mxu0 %v1180
        %1750 = vmatprep.subr.bf16.mxu0 %v1177
        %1751 = vmatpush1.bf16.msra.mxu0 %v1176
        %1752 = vmatprep.subr.bf16.mxu0 %v1173
        %1753 = vmatpush1.bf16.msra.mxu0 %v1172
        %1754 = vmatprep.subr.bf16.mxu0 %v1169
        %1755 = vmatpush1.bf16.msra.mxu0 %v1168
        %1756 = vmatprep.subr.bf16.mxu0 %v1165
        %1757 = vmatpush1.bf16.msra.mxu0 %v1164
        %1758 = vmatprep.subr.bf16.mxu0 %v1225
        %1759 = vmatpush2.bf16.msra.mxu0 %v1224
        %1760 = vmatprep.subr.bf16.mxu0 %v1221
        %1761 = vmatpush2.bf16.msra.mxu0 %v1220
        %1762 = vmatprep.subr.bf16.mxu0 %v1217
        %1763 = vmatpush2.bf16.msra.mxu0 %v1216
        %1764 = vmatprep.subr.bf16.mxu0 %v1213
        %1765 = vmatpush2.bf16.msra.mxu0 %v1212
        %1766 = vmatprep.subr.bf16.mxu0 %v1209
        %1767 = vmatpush2.bf16.msra.mxu0 %v1208
        %1768 = vmatprep.subr.bf16.mxu0 %v1205
        %1769 = vmatpush2.bf16.msra.mxu0 %v1204
        %1770 = vmatprep.subr.bf16.mxu0 %v1201
        %1771 = vmatpush2.bf16.msra.mxu0 %v1200
        %1772 = vmatprep.subr.bf16.mxu0 %v1197
        %1773 = vmatpush2.bf16.msra.mxu0 %v1196
        %1774 = vmatprep.mubr.bf16.mxu0 %v358
        %1775 = vmatmul.mubr.bf16.gmra.mxu0 %v357
        %v1776 = vpop.f32.mrf.mxu0
        %v1777 = vadd.f32 %v571, %v1776
        %v1778 = vpop.f32.mrf.mxu0
        %v1779 = vadd.f32 %v575, %v1778
        %v1780 = vpop.f32.mrf.mxu0
        %v1781 = vadd.f32 %v571, %v1780
        %v1782 = vpop.f32.mrf.mxu0
        %v1783 = vadd.f32 %v575, %v1782
        %1784 = vdwg.mxu0
        %1785 = vmatprep.subr.bf16.mxu0 %v1257
        %1786 = vmatpush1.bf16.msra.mxu0 %v1256
        %1787 = vmatprep.subr.bf16.mxu0 %v1253
        %1788 = vmatpush1.bf16.msra.mxu0 %v1252
        %1789 = vmatprep.subr.bf16.mxu0 %v1249
        %1790 = vmatpush1.bf16.msra.mxu0 %v1248
        %1791 = vmatprep.subr.bf16.mxu0 %v1245
        %1792 = vmatpush1.bf16.msra.mxu0 %v1244
        %1793 = vmatprep.subr.bf16.mxu0 %v1241
        %1794 = vmatpush1.bf16.msra.mxu0 %v1240
        %1795 = vmatprep.subr.bf16.mxu0 %v1237
        %1796 = vmatpush1.bf16.msra.mxu0 %v1236
        %1797 = vmatprep.subr.bf16.mxu0 %v1233
        %1798 = vmatpush1.bf16.msra.mxu0 %v1232
        %1799 = vmatprep.subr.bf16.mxu0 %v1229
        %1800 = vmatpush1.bf16.msra.mxu0 %v1228
        %1801 = vmatprep.subr.bf16.mxu0 %v1289
        %1802 = vmatpush2.bf16.msra.mxu0 %v1288
        %1803 = vmatprep.subr.bf16.mxu0 %v1285
        %1804 = vmatpush2.bf16.msra.mxu0 %v1284
        %1805 = vmatprep.subr.bf16.mxu0 %v1281
        %1806 = vmatpush2.bf16.msra.mxu0 %v1280
        %1807 = vmatprep.subr.bf16.mxu0 %v1277
        %1808 = vmatpush2.bf16.msra.mxu0 %v1276
        %1809 = vmatprep.subr.bf16.mxu0 %v1273
        %1810 = vmatpush2.bf16.msra.mxu0 %v1272
        %1811 = vmatprep.subr.bf16.mxu0 %v1269
        %1812 = vmatpush2.bf16.msra.mxu0 %v1268
        %1813 = vmatprep.subr.bf16.mxu0 %v1265
        %1814 = vmatpush2.bf16.msra.mxu0 %v1264
        %1815 = vmatprep.subr.bf16.mxu0 %v1261
        %1816 = vmatpush2.bf16.msra.mxu0 %v1260
        %1817 = vmatprep.mubr.bf16.mxu0 %v360
        %1818 = vmatmul.mubr.bf16.gmra.mxu0 %v359
        %v1819 = vpop.f32.mrf.mxu0
        %v1820 = vadd.f32 %v1777, %v1819
        %v1821 = vpop.f32.mrf.mxu0
        %v1822 = vadd.f32 %v1779, %v1821
        %v1823 = vpop.f32.mrf.mxu0
        %v1824 = vadd.f32 %v1781, %v1823
        %v1825 = vpop.f32.mrf.mxu0
        %v1826 = vadd.f32 %v1783, %v1825
        %1827 = vdwg.mxu0
        %1828 = vmatprep.subr.bf16.mxu0 %v1321
        %1829 = vmatpush1.bf16.msra.mxu0 %v1320
        %1830 = vmatprep.subr.bf16.mxu0 %v1317
        %1831 = vmatpush1.bf16.msra.mxu0 %v1316
        %1832 = vmatprep.subr.bf16.mxu0 %v1313
        %1833 = vmatpush1.bf16.msra.mxu0 %v1312
        %1834 = vmatprep.subr.bf16.mxu0 %v1309
        %1835 = vmatpush1.bf16.msra.mxu0 %v1308
        %1836 = vmatprep.subr.bf16.mxu0 %v1305
        %1837 = vmatpush1.bf16.msra.mxu0 %v1304
        %1838 = vmatprep.subr.bf16.mxu0 %v1301
        %1839 = vmatpush1.bf16.msra.mxu0 %v1300
        %1840 = vmatprep.subr.bf16.mxu0 %v1297
        %1841 = vmatpush1.bf16.msra.mxu0 %v1296
        %1842 = vmatprep.subr.bf16.mxu0 %v1293
        %1843 = vmatpush1.bf16.msra.mxu0 %v1292
        %1844 = vmatprep.subr.bf16.mxu0 %v1353
        %1845 = vmatpush2.bf16.msra.mxu0 %v1352
        %1846 = vmatprep.subr.bf16.mxu0 %v1349
        %1847 = vmatpush2.bf16.msra.mxu0 %v1348
        %1848 = vmatprep.subr.bf16.mxu0 %v1345
        %1849 = vmatpush2.bf16.msra.mxu0 %v1344
        %1850 = vmatprep.subr.bf16.mxu0 %v1341
        %1851 = vmatpush2.bf16.msra.mxu0 %v1340
        %1852 = vmatprep.subr.bf16.mxu0 %v1337
        %1853 = vmatpush2.bf16.msra.mxu0 %v1336
        %1854 = vmatprep.subr.bf16.mxu0 %v1333
        %1855 = vmatpush2.bf16.msra.mxu0 %v1332
        %1856 = vmatprep.subr.bf16.mxu0 %v1329
        %1857 = vmatpush2.bf16.msra.mxu0 %v1328
        %1858 = vmatprep.subr.bf16.mxu0 %v1325
        %1859 = vmatpush2.bf16.msra.mxu0 %v1324
        %1860 = vmatprep.mubr.bf16.mxu0 %v362
        %1861 = vmatmul.mubr.bf16.gmra.mxu0 %v361
        %v1862 = vpop.f32.mrf.mxu0
        %v1863 = vadd.f32 %v1820, %v1862
        %v1864 = vpop.f32.mrf.mxu0
        %v1865 = vadd.f32 %v1822, %v1864
        %v1866 = vpop.f32.mrf.mxu0
        %v1867 = vadd.f32 %v1824, %v1866
        %v1868 = vpop.f32.mrf.mxu0
        %v1869 = vadd.f32 %v1826, %v1868
        %1870 = vdwg.mxu0
        %1871 = vmatprep.subr.bf16.mxu0 0
        %1872 = vmatpush1.bf16.msra.mxu0 0
        %1873 = vmatprep.subr.bf16.mxu0 0
        %1874 = vmatpush1.bf16.msra.mxu0 0
        %1875 = vmatprep.subr.bf16.mxu0 0
        %1876 = vmatpush1.bf16.msra.mxu0 0
        %1877 = vmatprep.subr.bf16.mxu0 0
        %1878 = vmatpush1.bf16.msra.mxu0 0
        %1879 = vmatprep.subr.bf16.mxu0 0
        %1880 = vmatpush1.bf16.msra.mxu0 0
        %1881 = vmatprep.subr.bf16.mxu0 0
        %1882 = vmatpush1.bf16.msra.mxu0 0
        %1883 = vmatprep.subr.bf16.mxu0 0
        %1884 = vmatpush1.bf16.msra.mxu0 0
        %1885 = vmatprep.subr.bf16.mxu0 %v1568
        %1886 = vmatpush1.bf16.msra.mxu0 %v1565
        %1887 = vmatprep.subr.bf16.mxu0 0
        %1888 = vmatpush2.bf16.msra.mxu0 0
        %1889 = vmatprep.subr.bf16.mxu0 0
        %1890 = vmatpush2.bf16.msra.mxu0 0
        %1891 = vmatprep.subr.bf16.mxu0 0
        %1892 = vmatpush2.bf16.msra.mxu0 0
        %1893 = vmatprep.subr.bf16.mxu0 0
        %1894 = vmatpush2.bf16.msra.mxu0 0
        %1895 = vmatprep.subr.bf16.mxu0 0
        %1896 = vmatpush2.bf16.msra.mxu0 0
        %1897 = vmatprep.subr.bf16.mxu0 0
        %1898 = vmatpush2.bf16.msra.mxu0 0
        %1899 = vmatprep.subr.bf16.mxu0 0
        %1900 = vmatpush2.bf16.msra.mxu0 0
        %1901 = vmatprep.subr.bf16.mxu0 0
        %1902 = vmatpush2.bf16.msra.mxu0 0
        %1903 = vmatprep.mubr.bf16.mxu0 0
        %1904 = vmatmul.mubr.bf16.gmra.mxu0 %v1552
        %v1905 = vpop.f32.mrf.mxu0
        %v1906 = vadd.f32 %v1863, %v1905
        %v1907 = vpop.f32.mrf.mxu0
        %v1908 = vadd.f32 %v1865, %v1907
        %v1909 = vpop.f32.mrf.mxu0
        %v1910 = vadd.f32 %v1867, %v1909
        %v1911 = vpop.f32.mrf.mxu0
        %v1912 = vadd.f32 %v1869, %v1911
        %1913 = vdwg.mxu0
        %v1914 = vmax.f32 %v1734, 0.0
        %v1915 = vmax.f32 %v1736, 0.0
        %v1916 = vmax.f32 %v1906, 0.0
        %v1917 = vmax.f32 %v1908, 0.0
        %v1918 = vmax.f32 %v1738, 0.0
        %v1919 = vmax.f32 %v1740, 0.0
        %v1920 = vmax.f32 %v1910, 0.0
        %v1921 = vmax.f32 %v1912, 0.0
        %v1922 = vpack.c.bf16 %v1918, %v1914
        %v1923 = vpack.c.bf16 %v1919, %v1915
        %v1924 = vpack.c.bf16 %v1920, %v1916
        %v1925 = vpack.c.bf16 %v1921, %v1917
        %v1926 = vld [vmem:[#allocation7] sm:$0xff]
        %v1927 = vld [vmem:[#allocation7 + $0x8] sm:$0xff]
        %v1928 = vld [vmem:[#allocation7 + $0x10] sm:$0xff]
        %v1929 = vld [vmem:[#allocation7 + $0x18] sm:$0xff]
        %v1930 = vld [vmem:[#allocation7 + $0x20] sm:$0xff]
        %v1931 = vld [vmem:[#allocation7 + $0x28] sm:$0xff]
        %v1932 = vld [vmem:[#allocation7 + $0x30] sm:$0xff]
        %v1933 = vld [vmem:[#allocation7 + $0x38] sm:$0xff]
        %v1934 = vld [vmem:[#allocation7 + $0x40] sm:$0xff]
        %v1935 = vld [vmem:[#allocation7 + $0x48] sm:$0xff]
        %v1936 = vld [vmem:[#allocation7 + $0x50] sm:$0xff]
        %v1937 = vld [vmem:[#allocation7 + $0x58] sm:$0xff]
        %v1938 = vld [vmem:[#allocation7 + $0x60] sm:$0xff]
        %v1939 = vld [vmem:[#allocation7 + $0x68] sm:$0xff]
        %v1940 = vld [vmem:[#allocation7 + $0x70] sm:$0xff]
        %v1941 = vld [vmem:[#allocation7 + $0x78] sm:$0xff]
        %v1942 = vld [vmem:[#allocation7 + $0x80] sm:$0xff]
        %v1943 = vld [vmem:[#allocation7 + $0x88] sm:$0xff]
        %v1944 = vld [vmem:[#allocation7 + $0x90] sm:$0xff]
        %v1945 = vld [vmem:[#allocation7 + $0x98] sm:$0xff]
        %v1946 = vld [vmem:[#allocation7 + $0xa0] sm:$0xff]
        %v1947 = vld [vmem:[#allocation7 + $0xa8] sm:$0xff]
        %v1948 = vld [vmem:[#allocation7 + $0xb0] sm:$0xff]
        %v1949 = vld [vmem:[#allocation7 + $0xb8] sm:$0xff]
        %v1950 = vld [vmem:[#allocation7 + $0xc0] sm:$0xff]
        %v1951 = vld [vmem:[#allocation7 + $0xc8] sm:$0xff]
        %v1952 = vld [vmem:[#allocation7 + $0xd0] sm:$0xff]
        %v1953 = vld [vmem:[#allocation7 + $0xd8] sm:$0xff]
        %v1954 = vld [vmem:[#allocation7 + $0xe0] sm:$0xff]
        %v1955 = vld [vmem:[#allocation7 + $0xe8] sm:$0xff]
        %v1956 = vld [vmem:[#allocation7 + $0xf0] sm:$0xff]
        %v1957 = vld [vmem:[#allocation7 + $0xf8] sm:$0xff]
        %v1958 = vld [vmem:[#allocation7 + $0x100] sm:$0xff]
        %v1959 = vld [vmem:[#allocation7 + $0x108] sm:$0xff]
        %v1960 = vld [vmem:[#allocation7 + $0x110] sm:$0xff]
        %v1961 = vld [vmem:[#allocation7 + $0x118] sm:$0xff]
        %v1962 = vld [vmem:[#allocation7 + $0x120] sm:$0xff]
        %v1963 = vld [vmem:[#allocation7 + $0x128] sm:$0xff]
        %v1964 = vld [vmem:[#allocation7 + $0x130] sm:$0xff]
        %v1965 = vld [vmem:[#allocation7 + $0x138] sm:$0xff]
        %v1966 = vld [vmem:[#allocation7 + $0x140] sm:$0xff]
        %v1967 = vld [vmem:[#allocation7 + $0x148] sm:$0xff]
        %v1968 = vld [vmem:[#allocation7 + $0x150] sm:$0xff]
        %v1969 = vld [vmem:[#allocation7 + $0x158] sm:$0xff]
        %v1970 = vld [vmem:[#allocation7 + $0x160] sm:$0xff]
        %v1971 = vld [vmem:[#allocation7 + $0x168] sm:$0xff]
        %v1972 = vld [vmem:[#allocation7 + $0x170] sm:$0xff]
        %v1973 = vld [vmem:[#allocation7 + $0x178] sm:$0xff]
        %v1974 = vld [vmem:[#allocation7 + $0x180] sm:$0xff]
        %v1975 = vld [vmem:[#allocation7 + $0x188] sm:$0xff]
        %v1976 = vld [vmem:[#allocation7 + $0x190] sm:$0xff]
        %v1977 = vld [vmem:[#allocation7 + $0x198] sm:$0xff]
        %v1978 = vld [vmem:[#allocation7 + $0x1a0] sm:$0xff]
        %v1979 = vld [vmem:[#allocation7 + $0x1a8] sm:$0xff]
        %v1980 = vld [vmem:[#allocation7 + $0x1b0] sm:$0xff]
        %v1981 = vld [vmem:[#allocation7 + $0x1b8] sm:$0xff]
        %v1982 = vld [vmem:[#allocation7 + $0x1c0] sm:$0xff]
        %v1983 = vld [vmem:[#allocation7 + $0x1c8] sm:$0xff]
        %v1984 = vld [vmem:[#allocation7 + $0x1d0] sm:$0xff]
        %v1985 = vld [vmem:[#allocation7 + $0x1d8] sm:$0xff]
        %v1986 = vld [vmem:[#allocation7 + $0x1e0] sm:$0xff]
        %v1987 = vld [vmem:[#allocation7 + $0x1e8] sm:$0xff]
        %v1988 = vld [vmem:[#allocation7 + $0x1f0] sm:$0xff]
        %v1989 = vld [vmem:[#allocation7 + $0x1f8] sm:$0xff]
        %v1990 = vld [vmem:[%s4] sm:$0x3]
        %v1992 = vlaneseq
        %v1993 = vshrl.u32 %v1992, 7
        %v1994 = vsub.s32 0, %v1993
        %v1995 = vrot.slane %v1990, %v1994
        %v1996 = vlaneseq
        %v1997 = vshrl.u32 %v1996, 7
        %v1998 = vsub.s32 1, %v1997
        %v1999 = vrot.slane %v1990, %v1998
        %v2066 = vunpack.c.l.b16 %v1926
        %v2067 = vunpack.c.h.b16 %v1926
        %v2068 = vunpack.c.l.b16 %v1927
        %v2069 = vunpack.c.h.b16 %v1927
        %v2070 = vunpack.c.l.b16 %v1928
        %v2071 = vunpack.c.h.b16 %v1928
        %v2072 = vunpack.c.l.b16 %v1929
        %v2073 = vunpack.c.h.b16 %v1929
        %v2074 = vunpack.c.l.b16 %v1930
        %v2075 = vunpack.c.h.b16 %v1930
        %v2076 = vunpack.c.l.b16 %v1931
        %v2077 = vunpack.c.h.b16 %v1931
        %v2078 = vunpack.c.l.b16 %v1932
        %v2079 = vunpack.c.h.b16 %v1932
        %v2080 = vunpack.c.l.b16 %v1933
        %v2081 = vunpack.c.h.b16 %v1933
        %v2082 = vunpack.c.l.b16 %v1934
        %v2083 = vunpack.c.h.b16 %v1934
        %v2084 = vunpack.c.l.b16 %v1935
        %v2085 = vunpack.c.h.b16 %v1935
        %v2086 = vunpack.c.l.b16 %v1936
        %v2087 = vunpack.c.h.b16 %v1936
        %v2088 = vunpack.c.l.b16 %v1937
        %v2089 = vunpack.c.h.b16 %v1937
        %v2090 = vunpack.c.l.b16 %v1938
        %v2091 = vunpack.c.h.b16 %v1938
        %v2092 = vunpack.c.l.b16 %v1939
        %v2093 = vunpack.c.h.b16 %v1939
        %v2094 = vunpack.c.l.b16 %v1940
        %v2095 = vunpack.c.h.b16 %v1940
        %v2096 = vunpack.c.l.b16 %v1941
        %v2097 = vunpack.c.h.b16 %v1941
        %v2098 = vunpack.c.l.b16 %v1942
        %v2099 = vunpack.c.h.b16 %v1942
        %v2100 = vunpack.c.l.b16 %v1943
        %v2101 = vunpack.c.h.b16 %v1943
        %v2102 = vunpack.c.l.b16 %v1944
        %v2103 = vunpack.c.h.b16 %v1944
        %v2104 = vunpack.c.l.b16 %v1945
        %v2105 = vunpack.c.h.b16 %v1945
        %v2106 = vunpack.c.l.b16 %v1946
        %v2107 = vunpack.c.h.b16 %v1946
        %v2108 = vunpack.c.l.b16 %v1947
        %v2109 = vunpack.c.h.b16 %v1947
        %v2110 = vunpack.c.l.b16 %v1948
        %v2111 = vunpack.c.h.b16 %v1948
        %v2112 = vunpack.c.l.b16 %v1949
        %v2113 = vunpack.c.h.b16 %v1949
        %v2114 = vunpack.c.l.b16 %v1950
        %v2115 = vunpack.c.h.b16 %v1950
        %v2116 = vunpack.c.l.b16 %v1951
        %v2117 = vunpack.c.h.b16 %v1951
        %v2118 = vunpack.c.l.b16 %v1952
        %v2119 = vunpack.c.h.b16 %v1952
        %v2120 = vunpack.c.l.b16 %v1953
        %v2121 = vunpack.c.h.b16 %v1953
        %v2122 = vunpack.c.l.b16 %v1954
        %v2123 = vunpack.c.h.b16 %v1954
        %v2124 = vunpack.c.l.b16 %v1955
        %v2125 = vunpack.c.h.b16 %v1955
        %v2126 = vunpack.c.l.b16 %v1956
        %v2127 = vunpack.c.h.b16 %v1956
        %v2128 = vunpack.c.l.b16 %v1957
        %v2129 = vunpack.c.h.b16 %v1957
        %v2130 = vunpack.c.l.b16 %v1958
        %v2131 = vunpack.c.h.b16 %v1958
        %v2132 = vunpack.c.l.b16 %v1959
        %v2133 = vunpack.c.h.b16 %v1959
        %v2134 = vunpack.c.l.b16 %v1960
        %v2135 = vunpack.c.h.b16 %v1960
        %v2136 = vunpack.c.l.b16 %v1961
        %v2137 = vunpack.c.h.b16 %v1961
        %v2138 = vunpack.c.l.b16 %v1962
        %v2139 = vunpack.c.h.b16 %v1962
        %v2140 = vunpack.c.l.b16 %v1963
        %v2141 = vunpack.c.h.b16 %v1963
        %v2142 = vunpack.c.l.b16 %v1964
        %v2143 = vunpack.c.h.b16 %v1964
        %v2144 = vunpack.c.l.b16 %v1965
        %v2145 = vunpack.c.h.b16 %v1965
        %v2146 = vunpack.c.l.b16 %v1966
        %v2147 = vunpack.c.h.b16 %v1966
        %v2148 = vunpack.c.l.b16 %v1967
        %v2149 = vunpack.c.h.b16 %v1967
        %v2150 = vunpack.c.l.b16 %v1968
        %v2151 = vunpack.c.h.b16 %v1968
        %v2152 = vunpack.c.l.b16 %v1969
        %v2153 = vunpack.c.h.b16 %v1969
        %v2154 = vunpack.c.l.b16 %v1970
        %v2155 = vunpack.c.h.b16 %v1970
        %v2156 = vunpack.c.l.b16 %v1971
        %v2157 = vunpack.c.h.b16 %v1971
        %v2158 = vunpack.c.l.b16 %v1972
        %v2159 = vunpack.c.h.b16 %v1972
        %v2160 = vunpack.c.l.b16 %v1973
        %v2161 = vunpack.c.h.b16 %v1973
        %v2162 = vunpack.c.l.b16 %v1974
        %v2163 = vunpack.c.h.b16 %v1974
        %v2164 = vunpack.c.l.b16 %v1975
        %v2165 = vunpack.c.h.b16 %v1975
        %v2166 = vunpack.c.l.b16 %v1976
        %v2167 = vunpack.c.h.b16 %v1976
        %v2168 = vunpack.c.l.b16 %v1977
        %v2169 = vunpack.c.h.b16 %v1977
        %v2170 = vunpack.c.l.b16 %v1978
        %v2171 = vunpack.c.h.b16 %v1978
        %v2172 = vunpack.c.l.b16 %v1979
        %v2173 = vunpack.c.h.b16 %v1979
        %v2174 = vunpack.c.l.b16 %v1980
        %v2175 = vunpack.c.h.b16 %v1980
        %v2176 = vunpack.c.l.b16 %v1981
        %v2177 = vunpack.c.h.b16 %v1981
        %v2178 = vunpack.c.l.b16 %v1982
        %v2179 = vunpack.c.h.b16 %v1982
        %v2180 = vunpack.c.l.b16 %v1983
        %v2181 = vunpack.c.h.b16 %v1983
        %v2182 = vunpack.c.l.b16 %v1984
        %v2183 = vunpack.c.h.b16 %v1984
        %v2184 = vunpack.c.l.b16 %v1985
        %v2185 = vunpack.c.h.b16 %v1985
        %v2186 = vunpack.c.l.b16 %v1986
        %v2187 = vunpack.c.h.b16 %v1986
        %v2188 = vunpack.c.l.b16 %v1987
        %v2189 = vunpack.c.h.b16 %v1987
        %v2190 = vunpack.c.l.b16 %v1988
        %v2191 = vunpack.c.h.b16 %v1988
        %v2192 = vunpack.c.l.b16 %v1989
        %v2193 = vunpack.c.h.b16 %v1989
        %v2194 = vpack.c.b16 %v2068, %v2066
        %v2195 = vpack.c.b16 %v2069, %v2067
        %v2196 = vpack.c.b16 %v2072, %v2070
        %v2197 = vpack.c.b16 %v2073, %v2071
        %v2198 = vpack.c.b16 %v2076, %v2074
        %v2199 = vpack.c.b16 %v2077, %v2075
        %v2200 = vpack.c.b16 %v2080, %v2078
        %v2201 = vpack.c.b16 %v2081, %v2079
        %v2202 = vpack.c.b16 %v2084, %v2082
        %v2203 = vpack.c.b16 %v2085, %v2083
        %v2204 = vpack.c.b16 %v2088, %v2086
        %v2205 = vpack.c.b16 %v2089, %v2087
        %v2206 = vpack.c.b16 %v2092, %v2090
        %v2207 = vpack.c.b16 %v2093, %v2091
        %v2208 = vpack.c.b16 %v2096, %v2094
        %v2209 = vpack.c.b16 %v2097, %v2095
        %v2210 = vpack.c.b16 %v2100, %v2098
        %v2211 = vpack.c.b16 %v2101, %v2099
        %v2212 = vpack.c.b16 %v2104, %v2102
        %v2213 = vpack.c.b16 %v2105, %v2103
        %v2214 = vpack.c.b16 %v2108, %v2106
        %v2215 = vpack.c.b16 %v2109, %v2107
        %v2216 = vpack.c.b16 %v2112, %v2110
        %v2217 = vpack.c.b16 %v2113, %v2111
        %v2218 = vpack.c.b16 %v2116, %v2114
        %v2219 = vpack.c.b16 %v2117, %v2115
        %v2220 = vpack.c.b16 %v2120, %v2118
        %v2221 = vpack.c.b16 %v2121, %v2119
        %v2222 = vpack.c.b16 %v2124, %v2122
        %v2223 = vpack.c.b16 %v2125, %v2123
        %v2224 = vpack.c.b16 %v2128, %v2126
        %v2225 = vpack.c.b16 %v2129, %v2127
        %v2226 = vpack.c.b16 %v2132, %v2130
        %v2227 = vpack.c.b16 %v2133, %v2131
        %v2228 = vpack.c.b16 %v2136, %v2134
        %v2229 = vpack.c.b16 %v2137, %v2135
        %v2230 = vpack.c.b16 %v2140, %v2138
        %v2231 = vpack.c.b16 %v2141, %v2139
        %v2232 = vpack.c.b16 %v2144, %v2142
        %v2233 = vpack.c.b16 %v2145, %v2143
        %v2234 = vpack.c.b16 %v2148, %v2146
        %v2235 = vpack.c.b16 %v2149, %v2147
        %v2236 = vpack.c.b16 %v2152, %v2150
        %v2237 = vpack.c.b16 %v2153, %v2151
        %v2238 = vpack.c.b16 %v2156, %v2154
        %v2239 = vpack.c.b16 %v2157, %v2155
        %v2240 = vpack.c.b16 %v2160, %v2158
        %v2241 = vpack.c.b16 %v2161, %v2159
        %v2242 = vpack.c.b16 %v2164, %v2162
        %v2243 = vpack.c.b16 %v2165, %v2163
        %v2244 = vpack.c.b16 %v2168, %v2166
        %v2245 = vpack.c.b16 %v2169, %v2167
        %v2246 = vpack.c.b16 %v2172, %v2170
        %v2247 = vpack.c.b16 %v2173, %v2171
        %v2248 = vpack.c.b16 %v2176, %v2174
        %v2249 = vpack.c.b16 %v2177, %v2175
        %v2250 = vpack.c.b16 %v2180, %v2178
        %v2251 = vpack.c.b16 %v2181, %v2179
        %v2252 = vpack.c.b16 %v2184, %v2182
        %v2253 = vpack.c.b16 %v2185, %v2183
        %v2254 = vpack.c.b16 %v2188, %v2186
        %v2255 = vpack.c.b16 %v2189, %v2187
        %v2256 = vpack.c.b16 %v2192, %v2190
        %v2257 = vpack.c.b16 %v2193, %v2191
        %2322 = vmatprep.subr.bf16.mxu0 %v2209
        %2323 = vmatpush1.bf16.msra.mxu0 %v2208
        %2324 = vmatprep.subr.bf16.mxu0 %v2207
        %2325 = vmatpush1.bf16.msra.mxu0 %v2206
        %2326 = vmatprep.subr.bf16.mxu0 %v2205
        %2327 = vmatpush1.bf16.msra.mxu0 %v2204
        %2328 = vmatprep.subr.bf16.mxu0 %v2203
        %2329 = vmatpush1.bf16.msra.mxu0 %v2202
        %2330 = vmatprep.subr.bf16.mxu0 %v2201
        %2331 = vmatpush1.bf16.msra.mxu0 %v2200
        %2332 = vmatprep.subr.bf16.mxu0 %v2199
        %2333 = vmatpush1.bf16.msra.mxu0 %v2198
        %2334 = vmatprep.subr.bf16.mxu0 %v2197
        %2335 = vmatpush1.bf16.msra.mxu0 %v2196
        %2336 = vmatprep.subr.bf16.mxu0 %v2195
        %2337 = vmatpush1.bf16.msra.mxu0 %v2194
        %2338 = vmatprep.subr.bf16.mxu0 %v2225
        %2339 = vmatpush2.bf16.msra.mxu0 %v2224
        %2340 = vmatprep.subr.bf16.mxu0 %v2223
        %2341 = vmatpush2.bf16.msra.mxu0 %v2222
        %2342 = vmatprep.subr.bf16.mxu0 %v2221
        %2343 = vmatpush2.bf16.msra.mxu0 %v2220
        %2344 = vmatprep.subr.bf16.mxu0 %v2219
        %2345 = vmatpush2.bf16.msra.mxu0 %v2218
        %2346 = vmatprep.subr.bf16.mxu0 %v2217
        %2347 = vmatpush2.bf16.msra.mxu0 %v2216
        %2348 = vmatprep.subr.bf16.mxu0 %v2215
        %2349 = vmatpush2.bf16.msra.mxu0 %v2214
        %2350 = vmatprep.subr.bf16.mxu0 %v2213
        %2351 = vmatpush2.bf16.msra.mxu0 %v2212
        %2352 = vmatprep.subr.bf16.mxu0 %v2211
        %2353 = vmatpush2.bf16.msra.mxu0 %v2210
        %2354 = vmatprep.mubr.bf16.mxu0 %v1923
        %2355 = vmatmul.mubr.bf16.gmra.mxu0 %v1922
        %v2356 = vpop.f32.mrf.mxu0
        %v2357 = vadd.f32 %v1995, %v2356
        %v2358 = vpop.f32.mrf.mxu0
        %v2359 = vadd.f32 %v1999, %v2358
        %v2360 = vpop.f32.mrf.mxu0
        %v2361 = vadd.f32 %v1995, %v2360
        %v2362 = vpop.f32.mrf.mxu0
        %v2363 = vadd.f32 %v1999, %v2362
        %2364 = vdwg.mxu0
        %2365 = vmatprep.subr.bf16.mxu0 %v2241
        %2366 = vmatpush1.bf16.msra.mxu0 %v2240
        %2367 = vmatprep.subr.bf16.mxu0 %v2239
        %2368 = vmatpush1.bf16.msra.mxu0 %v2238
        %2369 = vmatprep.subr.bf16.mxu0 %v2237
        %2370 = vmatpush1.bf16.msra.mxu0 %v2236
        %2371 = vmatprep.subr.bf16.mxu0 %v2235
        %2372 = vmatpush1.bf16.msra.mxu0 %v2234
        %2373 = vmatprep.subr.bf16.mxu0 %v2233
        %2374 = vmatpush1.bf16.msra.mxu0 %v2232
        %2375 = vmatprep.subr.bf16.mxu0 %v2231
        %2376 = vmatpush1.bf16.msra.mxu0 %v2230
        %2377 = vmatprep.subr.bf16.mxu0 %v2229
        %2378 = vmatpush1.bf16.msra.mxu0 %v2228
        %2379 = vmatprep.subr.bf16.mxu0 %v2227
        %2380 = vmatpush1.bf16.msra.mxu0 %v2226
        %2381 = vmatprep.subr.bf16.mxu0 %v2257
        %2382 = vmatpush2.bf16.msra.mxu0 %v2256
        %2383 = vmatprep.subr.bf16.mxu0 %v2255
        %2384 = vmatpush2.bf16.msra.mxu0 %v2254
        %2385 = vmatprep.subr.bf16.mxu0 %v2253
        %2386 = vmatpush2.bf16.msra.mxu0 %v2252
        %2387 = vmatprep.subr.bf16.mxu0 %v2251
        %2388 = vmatpush2.bf16.msra.mxu0 %v2250
        %2389 = vmatprep.subr.bf16.mxu0 %v2249
        %2390 = vmatpush2.bf16.msra.mxu0 %v2248
        %2391 = vmatprep.subr.bf16.mxu0 %v2247
        %2392 = vmatpush2.bf16.msra.mxu0 %v2246
        %2393 = vmatprep.subr.bf16.mxu0 %v2245
        %2394 = vmatpush2.bf16.msra.mxu0 %v2244
        %2395 = vmatprep.subr.bf16.mxu0 %v2243
        %2396 = vmatpush2.bf16.msra.mxu0 %v2242
        %2397 = vmatprep.mubr.bf16.mxu0 %v1925
        %2398 = vmatmul.mubr.bf16.gmra.mxu0 %v1924
        %v2399 = vpop.f32.mrf.mxu0
        %v2400 = vadd.f32 %v2357, %v2399
        %v2401 = vpop.f32.mrf.mxu0
        %v2402 = vadd.f32 %v2359, %v2401
        %v2403 = vpop.f32.mrf.mxu0
        %v2404 = vadd.f32 %v2361, %v2403
        %v2405 = vpop.f32.mrf.mxu0
        %v2406 = vadd.f32 %v2363, %v2405
        %2407 = vdwg.mxu0
        %v2408 = vmax.f32 %v2400, 0.0
        %v2409 = vmax.f32 %v2402, 0.0
        %v2410 = vmax.f32 %v2404, 0.0
        %v2411 = vmax.f32 %v2406, 0.0
        %v2412 = vld [vmem:[%s5] sm:$0x3]
        %v2413 = vunpack.c.l.bf16 %v2412
        %v2415 = vlaneseq
        %v2416 = vshrl.u32 %v2415, 7
        %v2417 = vsub.s32 0, %v2416
        %v2418 = vrot.slane %v2413, %v2417
        %v2419 = vlaneseq
        %v2420 = vshrl.u32 %v2419, 7
        %v2421 = vsub.s32 2, %v2420
        %v2422 = vrot.slane %v2413, %v2421
        %v2425 = vlaneseq
        %v2426 = vshrl.u32 %v2425, 7
        %v2427 = vsub.s32 0, %v2426
        %v2428 = vrot.slane %v2418, %v2427
        %v2429 = vlaneseq
        %v2430 = vshrl.u32 %v2429, 7
        %v2431 = vsub.s32 0, %v2430
        %v2432 = vrot.slane %v2422, %v2431
        %v2433 = vmul.f32 %v2408, %v2428
        %v2434 = vmul.f32 %v2409, %v2432
        %v2435 = vmul.f32 %v2410, %v2428
        %v2436 = vmul.f32 %v2411, %v2432
        %v2437 = vadd.f32 %v2433, %v2434
        %2438 = vadd.xlane.f32.xlu0 %v2437
        %v2439 = vpop.xlane.xlu0 %2438
        %v2440 = vadd.f32 %v2435, %v2436
        %2441 = vadd.xlane.f32.xlu0 %v2440
        %v2442 = vpop.xlane.xlu0 %2441
        %s2443 = sld [smem:[#allocation2]]
        %v2444 = vstv %s2443
        %v2445 = vadd.f32 %v2439, %v2444
        %v2446 = vadd.f32 %v2442, %v2444
        %vm2447 = vcmask 7168
        %2448 = vst.msk [vmem:[%s330] sm:$0xff] %vm2447, %v2445
        %2449 = vst.msk [vmem:[%s330 + $0x8] sm:$0xff] %vm2447, %v2446
        %s2450 = sand.u32 %s183, 1
        %s2451 = sand.u32 %s183, 1
        %s2452 = smul.addr %s2451, 16
        %s2453 = scalar_lea.vmem [#allocation8], %s2452
        // Predicated region
        $region61: #{tpu_custom_call.1} parent=47 // pred_check
          %p2454 = pneg %p193
        $region62: #{tpu_custom_call.1} parent=47 // pred_check_branch
          %2456 = sbr.rel (%p2454) target = $region64
        $region63: #{tpu_custom_call.1} parent=47 // pred_region
          %s2457 = smul.u32 2, %s23
          %s2458 = ssub.s32 5, %s2457
          %p2459 = scmp.lt.s32.totalorder %s2458, 2
          %s2460 = scalar_select %p2459, %s2458, 2
          %s2461 = smul.u32 128, %s2460
          %p2462 = scmp.ne.s32.totalorder 0, %s2461
          %s2463 = smul.addr %s2457, 8
          %s2464 = scalar_lea.vmem %s7, %s2463
          // Predicated region
          $region65: #{tpu_custom_call.1} parent=63 // pred_check
            %p2465 = pneg %p2462
          $region66: #{tpu_custom_call.1} parent=63 // pred_check_branch
            %2467 = sbr.rel (%p2465) target = $region68
          $region67: #{tpu_custom_call.1} parent=63 // pred_region
            // Predicated region
            $region69: #{tpu_custom_call.1} parent=67 // pred_check
              _
            $region70: #{tpu_custom_call.1} parent=67 // pred_check_branch
              %2469 = sbr.rel (0) target = $region72
            $region71: #{tpu_custom_call.1} parent=67 // pred_region
              // Predicated region
              $region91: #{tpu_custom_call.1} parent=71 // pred_check
                _
              $region92: #{tpu_custom_call.1} parent=71 // pred_check_branch
                %2521 = sbr.rel (0) target = $region94
              $region93: #{tpu_custom_call.1} parent=71 // pred_region
                %s2522 = sshrl.u32 %s2460, 1
                // While loop
                $region95: #{tpu_custom_call.1} parent=93 // loop_pre_header
                  _
                $region96: #{tpu_custom_call.1} parent=93 // loop_header
                  %s2524 = sphi 0, %s2526
                  %p2525 = scmp.ge.s32.totalorder %s2524, %s2522
                  %s2529 = sphi 0, %s2538
                  %s2530 = sphi %s2453, %s2541
                  %s2531 = sphi %s2464, %s2542
                $region97: #{tpu_custom_call.1} parent=93 // loop_header_branch
                  %2528 = sbr.rel (%p2525) target = $region101
                $region98: #{tpu_custom_call.1} parent=93 // loop_body
                  %v2532 = vld [vmem:[%s2530] sm:$0xff]
                  %2533 = vst [vmem:[%s2531] sm:$0xff] %v2532
                  %v2534 = vld [vmem:[%s2530 + $0x8] sm:$0xff]
                  %2535 = vst [vmem:[%s2531 + $0x8] sm:$0xff] %v2534
                  %s2536 = sadd.s32 1, %s2529
                  %p2537 = scmp.ge.s32.totalorder %s2536, %s2522
                  %s2538 = scalar_select %p2537, 0, %s2536
                  %s2539 = smul.u32 %s2538, 16
                  %s2540 = smul.u32 %s2538, 16
                  %s2541 = scalar_lea.vmem %s2453, %s2539 [#allocation8]
                  %s2542 = scalar_lea.vmem %s2464, %s2540
                $region99: #{tpu_custom_call.1} parent=93 // loop_footer
                  %s2526 = sadd.s32 %s2524, 1
                $region100: #{tpu_custom_call.1} parent=93 // loop_footer_branch
                  %2523 = sbr.rel target = $region96
                $region101: #{tpu_custom_call.1} parent=93 // loop_exit
                  _
                %s2543 = sshrl.u32 %s2460, 1
                %s2544 = sand.u32 %s2460, 1
                %s2545 = smul.u32 %s2543, 2
                %s2546 = smul.u32 8, %s2545
                %s2547 = scalar_lea.vmem %s2453, %s2546 [#allocation8]
                %s2548 = smul.u32 8, %s2545
                %s2549 = scalar_lea.vmem %s2464, %s2548
                // While loop
                $region102: #{tpu_custom_call.1} parent=93 // loop_pre_header
                  _
                $region103: #{tpu_custom_call.1} parent=93 // loop_header
                  %s2551 = sphi 0, %s2553
                  %p2552 = scmp.ge.s32.totalorder %s2551, %s2544
                  %s2556 = sphi 0, %s2563
                  %s2557 = sphi %s2547, %s2566
                  %s2558 = sphi %s2549, %s2567
                $region104: #{tpu_custom_call.1} parent=93 // loop_header_branch
                  %2555 = sbr.rel (%p2552) target = $region108
                $region105: #{tpu_custom_call.1} parent=93 // loop_body
                  %v2559 = vld [vmem:[%s2557] sm:$0xff]
                  %2560 = vst [vmem:[%s2558] sm:$0xff] %v2559
                  %s2561 = sadd.s32 1, %s2556
                  %p2562 = scmp.ge.s32.totalorder %s2561, %s2544
                  %s2563 = scalar_select %p2562, 0, %s2561
                  %s2564 = smul.u32 %s2563, 8
                  %s2565 = smul.u32 %s2563, 8
                  %s2566 = scalar_lea.vmem %s2547, %s2564 [#allocation8]
                  %s2567 = scalar_lea.vmem %s2549, %s2565
                $region106: #{tpu_custom_call.1} parent=93 // loop_footer
                  %s2553 = sadd.s32 %s2551, 1
                $region107: #{tpu_custom_call.1} parent=93 // loop_footer_branch
                  %2550 = sbr.rel target = $region103
                $region108: #{tpu_custom_call.1} parent=93 // loop_exit
                  _
              $region94: #{tpu_custom_call.1} parent=71 // pred_fallthru
                _
              // Predicated region
              $region109: #{tpu_custom_call.1} parent=71 // pred_check
                _
              $region110: #{tpu_custom_call.1} parent=71 // pred_check_branch
                %2569 = sbr.rel target = $region112
              $region111: #{tpu_custom_call.1} parent=71 // pred_region
                _
              $region112: #{tpu_custom_call.1} parent=71 // pred_fallthru
                _
            $region72: #{tpu_custom_call.1} parent=67 // pred_fallthru
              _
            // Predicated region
            $region73: #{tpu_custom_call.1} parent=67 // pred_check
              _
            $region74: #{tpu_custom_call.1} parent=67 // pred_check_branch
              %2471 = sbr.rel target = $region76
            $region75: #{tpu_custom_call.1} parent=67 // pred_region
              %s2473 = ssub.s32 256, 1
              %s2474 = sshrl.u32 %s2460, 1
              // While loop
              $region77: #{tpu_custom_call.1} parent=75 // loop_pre_header
                _
              $region78: #{tpu_custom_call.1} parent=75 // loop_header
                %s2476 = sphi 0, %s2478
                %p2477 = scmp.ge.s32.totalorder %s2476, %s2474
                %s2481 = sphi 0, %s2490
                %s2482 = sphi %s2453, %s2493
                %s2483 = sphi %s2464, %s2494
              $region79: #{tpu_custom_call.1} parent=75 // loop_header_branch
                %2480 = sbr.rel (%p2477) target = $region83
              $region80: #{tpu_custom_call.1} parent=75 // loop_body
                %v2484 = vld [vmem:[%s2482] sm:%s2473]
                %2485 = vst [vmem:[%s2483] sm:%s2473] %v2484
                %v2486 = vld [vmem:[%s2482 + $0x8] sm:%s2473]
                %2487 = vst [vmem:[%s2483 + $0x8] sm:%s2473] %v2486
                %s2488 = sadd.s32 1, %s2481
                %p2489 = scmp.ge.s32.totalorder %s2488, %s2474
                %s2490 = scalar_select %p2489, 0, %s2488
                %s2491 = smul.u32 %s2490, 16
                %s2492 = smul.u32 %s2490, 16
                %s2493 = scalar_lea.vmem %s2453, %s2491 [#allocation8]
                %s2494 = scalar_lea.vmem %s2464, %s2492
              $region81: #{tpu_custom_call.1} parent=75 // loop_footer
                %s2478 = sadd.s32 %s2476, 1
              $region82: #{tpu_custom_call.1} parent=75 // loop_footer_branch
                %2475 = sbr.rel target = $region78
              $region83: #{tpu_custom_call.1} parent=75 // loop_exit
                _
              %s2495 = sshrl.u32 %s2460, 1
              %s2496 = sand.u32 %s2460, 1
              %s2497 = smul.u32 %s2495, 2
              %s2498 = smul.u32 8, %s2497
              %s2499 = scalar_lea.vmem %s2453, %s2498 [#allocation8]
              %s2500 = smul.u32 8, %s2497
              %s2501 = scalar_lea.vmem %s2464, %s2500
              // While loop
              $region84: #{tpu_custom_call.1} parent=75 // loop_pre_header
                _
              $region85: #{tpu_custom_call.1} parent=75 // loop_header
                %s2503 = sphi 0, %s2505
                %p2504 = scmp.ge.s32.totalorder %s2503, %s2496
                %s2508 = sphi 0, %s2515
                %s2509 = sphi %s2499, %s2518
                %s2510 = sphi %s2501, %s2519
              $region86: #{tpu_custom_call.1} parent=75 // loop_header_branch
                %2507 = sbr.rel (%p2504) target = $region90
              $region87: #{tpu_custom_call.1} parent=75 // loop_body
                %v2511 = vld [vmem:[%s2509] sm:%s2473]
                %2512 = vst [vmem:[%s2510] sm:%s2473] %v2511
                %s2513 = sadd.s32 1, %s2508
                %p2514 = scmp.ge.s32.totalorder %s2513, %s2496
                %s2515 = scalar_select %p2514, 0, %s2513
                %s2516 = smul.u32 %s2515, 8
                %s2517 = smul.u32 %s2515, 8
                %s2518 = scalar_lea.vmem %s2499, %s2516 [#allocation8]
                %s2519 = scalar_lea.vmem %s2501, %s2517
              $region88: #{tpu_custom_call.1} parent=75 // loop_footer
                %s2505 = sadd.s32 %s2503, 1
              $region89: #{tpu_custom_call.1} parent=75 // loop_footer_branch
                %2502 = sbr.rel target = $region85
              $region90: #{tpu_custom_call.1} parent=75 // loop_exit
                _
            $region76: #{tpu_custom_call.1} parent=67 // pred_fallthru
              _
          $region68: #{tpu_custom_call.1} parent=63 // pred_fallthru
            _
          %2570 = vnop
        $region64: #{tpu_custom_call.1} parent=47 // pred_fallthru
          _
      $region48: #{tpu_custom_call.1} parent=5 // pred_fallthru
        _
      %p2571 = scmp.le.s32.totalorder 2, %s18
      // Predicated region
      $region113: #{tpu_custom_call.1} parent=5 // pred_check
        %p2572 = pneg %p2571
      $region114: #{tpu_custom_call.1} parent=5 // pred_check_branch
        %2574 = sbr.rel (%p2572) target = $region116
      $region115: #{tpu_custom_call.1} parent=5 // pred_region
        %s2575 = ssub.s32 %s18, 2
        // Predicated region
        $region117: #{tpu_custom_call.1} parent=115 // pred_check
          %p2576 = pneg %p199
        $region118: #{tpu_custom_call.1} parent=115 // pred_check_branch
          %2578 = sbr.rel (%p2576) target = $region120
        $region119: #{tpu_custom_call.1} parent=115 // pred_region
          %s2579 = sand.u32 %s184, 1
          %s2580 = sand.u32 %s184, 1
          %s2581 = smul.addr %s2580, 16
          %s2582 = scalar_lea.vmem [#allocation8], %s2581
        $region120: #{tpu_custom_call.1} parent=115 // pred_fallthru
          _
      $region116: #{tpu_custom_call.1} parent=5 // pred_fallthru
        _
    $region6: #{tpu_custom_call.1} parent=1 // loop_footer
      %s22 = sadd.s32 1, %s18
    $region7: #{tpu_custom_call.1} parent=1 // loop_footer_branch
      %17 = sbr.rel target = $region3
    $region8: #{tpu_custom_call.1} parent=1 // loop_exit
      _
    %2583 = vsyncpa [#allocation4], 1
    %s2584 = scalar_lea.sflag [#allocation4], 1
    %2585 = vsyncpa %s2584, 1
    %2586 = vsyncpa [#allocation6], 1

</llo_original>
